<compile_context>
chip_gen: v6e
topology: v6e:2x2x1
jax: 0.10.0
libtpu: 0.0.40
codegen_flags: <defaults>
</compile_context>

<pallas_src>
import math

import jax
import jax.numpy as jnp
from jax import lax
from jax.experimental import pallas as pl
from jax.experimental.pallas import tpu as pltpu


def _round_up(x, m):
    return -(-x // m) * m


def _vmem_capacity_bytes():
    try:
        return int(pltpu.get_tpu_info().vmem_capacity_bytes)
    except Exception:
        return 64 * 1024 * 1024  # conservative fallback: v7x per-TensorCore VMEM


def _disc_score_kernel(wc_ref, hpl_ref, hmi_ref, b_ref, out_ref):
    # wc_ref:  (1, 1, H)   VMEM   W @ c[b], already in the h dtype
    # hpl_ref: (1, TN, H)  VMEM   positive node tile
    # hmi_ref: (1, TN, H)  VMEM   negative node tile
    # b_ref:   (1, 1)      SMEM   bilinear bias (f32 scalar)
    # out_ref: (1, 2, TN)  VMEM   row 0: positive scores, row 1: negative scores
    wc = wc_ref[0]          # (1, H)
    hpl = hpl_ref[0]        # (TN, H) -- stays in input dtype (no full-tile upcast)
    hmi = hmi_ref[0]        # (TN, H)
    bias = b_ref[0, 0]

    # sc[0, n] = sum_h wc[0, h] * h[n, h]: MXU dot contracting dim 1 of both operands
    # (native trans_b path -> lane-dense (1, TN) result, no XLU transpose of the
    # big streamed tile, f32 accumulate).
    dn = (((1,), (1,)), ((), ()))
    sc1 = lax.dot_general(wc, hpl, dn, preferred_element_type=jnp.float32) + bias
    sc2 = lax.dot_general(wc, hmi, dn, preferred_element_type=jnp.float32) + bias

    # Single (2, TN) store instead of two sublane-masked (1, TN) stores.
    out_ref[0] = jnp.concatenate([sc1, sc2], axis=0).astype(out_ref.dtype)


def _pick_tile_n(n, h, itemsize, tile_byte_target):
    """Node-tile rows: largest multiple of 128 whose *lane-padded* VMEM footprint
    (TN * round_up(H, 128) * itemsize) fits the byte target.  If the whole node axis
    already fits, a single tile (block dim == full array dim, always legal) is used;
    otherwise the ragged tail is handled by a cdiv grid with a partial boundary block.
    """
    h_lanes = _round_up(max(h, 1), 128)
    budget_rows = max(128, (tile_byte_target // (h_lanes * itemsize)) // 128 * 128)
    if n <= budget_rows:
        return n
    return budget_rows


def init_discriminator_params(key, n_h):
    """Matches torch.nn.init.xavier_uniform_ on Bilinear weight (1, n_h, n_h); bias = 0."""
    fan_in = n_h * n_h      # shape[1] * receptive_field (shape[2:])
    fan_out = 1 * n_h       # shape[0] * receptive_field
    bound = math.sqrt(6.0 / (fan_in + fan_out))
    w = jax.random.uniform(key, (1, n_h, n_h), jnp.float32, -bound, bound)
    return {"weight": w[0], "bias": jnp.zeros((), jnp.float32)}


def discriminator_forward(params, c, h_pl, h_mi, s_bias1=None, s_bias2=None):
    B, N, H = h_pl.shape
    assert h_mi.shape == (B, N, H) and c.shape == (B, H)
    out_dtype = h_pl.dtype

    # Tiny (B,H)x(H,H) precompute, hoisted out of the streamed path:
    #   wc[b, i] = sum_j W[i, j] * c[b, j]
    w = params["weight"].astype(jnp.float32)
    wc = jnp.einsum("bj,ij->bi", c.astype(jnp.float32), w)
    wc = wc.astype(h_pl.dtype).reshape(B, 1, H)

    bias = params["bias"].astype(jnp.float32).reshape(1, 1)

    itemsize = jnp.dtype(h_pl.dtype).itemsize
    out_itemsize = jnp.dtype(out_dtype).itemsize

    # Per-generation VMEM budget: 64 MiB/TC on v7x, 128 MiB on v5e/v6e.
    vmem_cap = _vmem_capacity_bytes()
    cap = (3 * vmem_cap) // 4                              # leave compiler headroom
    tile_target = min(4 << 20, max(1 << 20, cap // 8))     # ~4 MiB per h tile

    tn = _pick_tile_n(N, H, itemsize, tile_target)
    grid_n = pl.cdiv(N, tn)      # partial boundary block handles a ragged node axis
    grid = (B, grid_n)

    # Deeper pipeline on the two big streams when there are enough node tiles: the
    # per-step compute is a single short matvec, so the pipeline is pure DMA.
    deep_pipeline = (grid_n >= 3) and hasattr(pl, "Buffered")
    n_buf = 3 if deep_pipeline else 2

    # Lane/sublane-padded VMEM accounting (minor dim pads to 128 lanes, 2nd-minor to 8).
    h_lanes = _round_up(max(H, 1), 128)
    tile_vmem = _round_up(tn, 8) * h_lanes * itemsize
    wc_vmem = 8 * h_lanes * itemsize
    out_vmem = 8 * _round_up(tn, 128) * out_itemsize
    need = 2 * n_buf * tile_vmem + 2 * wc_vmem + 2 * out_vmem + (2 << 20)
    vmem_limit = int(min(cap, max(16 << 20, need)))

    def h_spec():
        if deep_pipeline:
            return pl.BlockSpec((1, tn, H), lambda b, n: (b, n, 0),
                                pipeline_mode=pl.Buffered(n_buf))
        return pl.BlockSpec((1, tn, H), lambda b, n: (b, n, 0))

    scores = pl.pallas_call(
        _disc_score_kernel,
        out_shape=jax.ShapeDtypeStruct((B, 2, N), out_dtype),
        grid_spec=pltpu.PrefetchScalarGridSpec(
            num_scalar_prefetch=0,
            grid=grid,
            in_specs=[
                pl.BlockSpec((1, 1, H), lambda b, n: (b, 0, 0)),     # wc
                h_spec(),                                            # h_pl tile
                h_spec(),                                            # h_mi tile
                pl.BlockSpec(memory_space=pltpu.MemorySpace.SMEM),   # bias scalar
            ],
            out_specs=pl.BlockSpec((1, 2, tn), lambda b, n: (b, 0, n)),
        ),
        compiler_params=pltpu.CompilerParams(
            dimension_semantics=("parallel", "parallel"),
            vmem_limit_bytes=vmem_limit,
        ),
    )(wc, h_pl, h_mi, bias)

    # (B, 2, N) -> (B, 2N): row-major reshape == torch.cat([sc_1, sc_2], dim=1).
    logits = scores.reshape(B, 2 * N)

    # Optional additive score biases (glue, outside the hot path).
    if s_bias1 is not None:
        logits = logits.at[:, :N].add(s_bias1)
    if s_bias2 is not None:
        logits = logits.at[:, N:].add(s_bias2)
    return logits


def _reference_forward(params, c, h_pl, h_mi, s_bias1=None, s_bias2=None):
    w = params["weight"].astype(jnp.float32)
    b = params["bias"].astype(jnp.float32)
    wc = jnp.einsum("ij,bj->bi", w, c.astype(jnp.float32))              # (B, H)
    sc1 = jnp.einsum("bni,bi->bn", h_pl.astype(jnp.float32), wc) + b
    sc2 = jnp.einsum("bni,bi->bn", h_mi.astype(jnp.float32), wc) + b
    if s_bias1 is not None:
        sc1 = sc1 + s_bias1
    if s_bias2 is not None:
        sc2 = sc2 + s_bias2
    return jnp.concatenate([sc1, sc2], axis=1)


if __name__ == "__main__":
    key = jax.random.PRNGKey(0)

    # (B, N, H, dtype):
    #   1) aligned N, single node tile per batch
    #   2) tiny irregular N (block == full dim)
    #   3) ragged N > tile budget -> cdiv grid with a partial boundary block
    #   4) many node tiles -> Buffered(3) deep-pipeline path
    #   5) bf16 streams (halved HBM traffic, f32 accumulate)
    cases = [
        (2, 2048, 64, jnp.float32),
        (2, 8, 32, jnp.float32),
        (1, 8320, 64, jnp.float32),
        (1, 24576, 64, jnp.float32),
        (2, 1024, 128, jnp.bfloat16),
    ]
    for (B, N, H, dtype) in cases:
        k_w, k_c, k_pl, k_mi, key = jax.random.split(key, 5)
        params = init_discriminator_params(k_w, H)
        c = jax.random.normal(k_c, (B, H), jnp.float32).astype(dtype)
        h_pl = jax.random.normal(k_pl, (B, N, H), jnp.float32).astype(dtype)
        h_mi = jax.random.normal(k_mi, (B, N, H), jnp.float32).astype(dtype)

        logits = discriminator_forward(params, c, h_pl, h_mi)
        jax.block_until_ready(logits)

        ref = _reference_forward(params, c, h_pl, h_mi)
        assert logits.shape == (B, 2 * N)
        tol = 2e-4 if dtype == jnp.float32 else 1e-1
        err = float(jnp.max(jnp.abs(logits.astype(jnp.float32) - ref)))
        assert err <= tol, (B, N, H, str(dtype), err)

    print("KERNEL_OK")
</pallas_src>

<mosaic_0001>
module attributes {stable_mosaic.version = 11 : i64} {
  func.func @_disc_score_kernel(%arg0: i32, %arg1: i32, %arg2: memref<1x1x64xf32, #tpu.memory_space<vmem>>, %arg3: memref<1x2048x64xf32, #tpu.memory_space<vmem>>, %arg4: memref<1x2048x64xf32, #tpu.memory_space<vmem>>, %arg5: memref<1x1xf32, #tpu.memory_space<smem>>, %arg6: memref<1x2x2048xf32, #tpu.memory_space<vmem>>) attributes {dimension_semantics = [#tpu.dimension_semantics<parallel>, #tpu.dimension_semantics<parallel>], iteration_bounds = array<i64: 2, 1>, scalar_prefetch = 0 : i64, scratch_operands = 0 : i64, tpu.core_type = #tpu.core_type<tc>, window_params = [{transform_indices = @transform_0, window_bounds = array<i64: 1, 1, 64>}, {transform_indices = @transform_1, window_bounds = array<i64: 1, 2048, 64>}, {transform_indices = @transform_2, window_bounds = array<i64: 1, 2048, 64>}, {transform_indices = @transform_3, window_bounds = array<i64: 1, 1>}, {transform_indices = @transform_4, window_bounds = array<i64: 1, 2, 2048>}]} {
    %c0 = arith.constant 0 : index
    %c0_0 = arith.constant 0 : index
    %c0_1 = arith.constant 0 : index
    %0 = vector.load %arg2[%c0, %c0_0, %c0_1] : memref<1x1x64xf32, #tpu.memory_space<vmem>>, vector<1x1x64xf32>
    %1 = vector.shape_cast %0 : vector<1x1x64xf32> to vector<1x64xf32>
    %c0_2 = arith.constant 0 : index
    %c0_3 = arith.constant 0 : index
    %c0_4 = arith.constant 0 : index
    %2 = vector.load %arg3[%c0_2, %c0_3, %c0_4] : memref<1x2048x64xf32, #tpu.memory_space<vmem>>, vector<1x2048x64xf32>
    %3 = vector.shape_cast %2 : vector<1x2048x64xf32> to vector<2048x64xf32>
    %c0_5 = arith.constant 0 : index
    %c0_6 = arith.constant 0 : index
    %c0_7 = arith.constant 0 : index
    %4 = vector.load %arg4[%c0_5, %c0_6, %c0_7] : memref<1x2048x64xf32, #tpu.memory_space<vmem>>, vector<1x2048x64xf32>
    %5 = vector.shape_cast %4 : vector<1x2048x64xf32> to vector<2048x64xf32>
    %c0_8 = arith.constant 0 : index
    %c0_9 = arith.constant 0 : index
    %6 = memref.load %arg5[%c0_8, %c0_9] : memref<1x1xf32, #tpu.memory_space<smem>>
    %cst = arith.constant dense<0.000000e+00> : vector<1x2048xf32>
    %7 = tpu.matmul %1, %3, %cst {dimension_numbers = #tpu.dot_dimension_numbers<[1], [1], [0], [0], [0, 0, 1, 0], [], []>} : vector<1x64xf32>, vector<2048x64xf32>, vector<1x2048xf32> -> vector<1x2048xf32>
    %8 = vector.broadcast %6 : f32 to vector<1x2048xf32>
    %9 = arith.addf %7, %8 : vector<1x2048xf32>
    %cst_10 = arith.constant dense<0.000000e+00> : vector<1x2048xf32>
    %10 = tpu.matmul %1, %5, %cst_10 {dimension_numbers = #tpu.dot_dimension_numbers<[1], [1], [0], [0], [0, 0, 1, 0], [], []>} : vector<1x64xf32>, vector<2048x64xf32>, vector<1x2048xf32> -> vector<1x2048xf32>
    %11 = vector.broadcast %6 : f32 to vector<1x2048xf32>
    %12 = arith.addf %10, %11 : vector<1x2048xf32>
    %13 = tpu.concatenate %9, %12 in 0 : vector<1x2048xf32>, vector<1x2048xf32> -> vector<2x2048xf32>
    %c0_11 = arith.constant 0 : index
    %c0_12 = arith.constant 0 : index
    %c0_13 = arith.constant 0 : index
    %14 = vector.load %arg6[%c0_11, %c0_12, %c0_13] : memref<1x2x2048xf32, #tpu.memory_space<vmem>>, vector<1x2x2048xf32>
    %15 = vector.shape_cast %14 : vector<1x2x2048xf32> to vector<2x2048xf32>
    %16 = vector.shape_cast %13 : vector<2x2048xf32> to vector<1x2x2048xf32>
    tpu.vector_store %arg6[%c0_11, %c0_12, %c0_13], %16 {strides = array<i32>} : memref<1x2x2048xf32, #tpu.memory_space<vmem>>, vector<1x2x2048xf32>,
    return
  }
  func.func @transform_0(%arg0: i32, %arg1: i32) -> (i32, i32, i32) {
    %c0_i32 = arith.constant 0 : i32
    %c0_i32_0 = arith.constant 0 : i32
    %c0_i32_1 = arith.constant 0 : i32
    return %arg0, %c0_i32, %c0_i32_0 : i32, i32, i32
  }
  func.func @transform_1(%arg0: i32, %arg1: i32) -> (i32, i32, i32) {
    %c0_i32 = arith.constant 0 : i32
    %c0_i32_0 = arith.constant 0 : i32
    return %arg0, %arg1, %c0_i32 : i32, i32, i32
  }
  func.func @transform_2(%arg0: i32, %arg1: i32) -> (i32, i32, i32) {
    %c0_i32 = arith.constant 0 : i32
    %c0_i32_0 = arith.constant 0 : i32
    return %arg0, %arg1, %c0_i32 : i32, i32, i32
  }
  func.func @transform_3(%arg0: i32, %arg1: i32) -> (i32, i32) {
    %c0_i32 = arith.constant 0 : i32
    %c0_i32_0 = arith.constant 0 : i32
    %c0_i32_1 = arith.constant 0 : i32
    return %c0_i32, %c0_i32_0 : i32, i32
  }
  func.func @transform_4(%arg0: i32, %arg1: i32) -> (i32, i32, i32) {
    %c0_i32 = arith.constant 0 : i32
    %c0_i32_0 = arith.constant 0 : i32
    return %arg0, %c0_i32, %arg1 : i32, i32, i32
  }
}

</mosaic_0001>

<llo_original>
// kernel: tpu_custom_call.1
$region0: #{tpu_custom_call.1}
  #allocation0 [shape = 'u32[]', space=smem, size = 0x4, offset = 0x4, fixed_abs, tag = 'smem constant byte address 0x4 - core index']
  #allocation1 [shape = 'u32[144,128]{1,0:T(1,128)}', space=vmem, size = 0x12000, scoped, tag = 'internal scratch']
  #allocation2 [shape = 'f32[1,1]{1,0:T(1,128)S(6)}', space=smem, size = 0x200, scoped, tag = 'scoped memory for tpu_custom_call.1']
  %s0 = inlined_call_operand.vmem [shape: f32[2,1,64], index: 0, kind: input, shape index: {}]
  %s1 = inlined_call_operand.vmem [shape: f32[2,2048,64], index: 1, kind: input, shape index: {}]
  %s2 = inlined_call_operand.vmem [shape: f32[2,2048,64], index: 2, kind: input, shape index: {}]
  %s3 = inlined_call_operand.<no memory space> [shape: f32[1,1], index: 3, kind: input, shape index: {}]
  %s4 = inlined_call_operand.hbm [shape: f32[2,2,2048], index: 4, kind: output, shape index: {}]
  %s5 = sld [smem:[#allocation0]]
  $region49: #{tpu_custom_call.1} parent=0
    _
  %s7 = ssub.s32 1, %s5
  %s8 = scalar_select 0, %s7, %s5
  %9 = sst [smem:[#allocation2]] %s3
  $region1: #{tpu_custom_call.1} parent=0
    #allocation3 [shape = 'u8[32768]{0}', space=vmem, size = 0x8000, scoped, tag = 'output window, operand 0']
    #allocation4 [shape = 's32[2]{0}', space=sflag, size = 0x8, scoped, tag = 'scoped memory for tpu_custom_call.1']
    %10 = vsyncpa [#allocation4], 0
    %s11 = scalar_lea.sflag [#allocation4], 1
    %12 = vsyncpa %s11, 0
    loop: start=0, step=1, limit=4
    $region2: #{tpu_custom_call.1} parent=1 // loop_pre_header
      _
    $region3: #{tpu_custom_call.1} parent=1 // loop_header
      %s14 = sphi 0, %s18
      %p15 = scmp.ge.s32.totalorder %s14, 4
      %s21 = sphi 0, %s33
      %s22 = sphi 0, %s29
      %s23 = sphi 0, %s21
      %s24 = sphi 0, %s22
      %s25 = sphi 0, %s23
      %s26 = sphi 0, %s24
      %s36 = sphi 0, %s38
      %s39 = sphi 0, %s36
      %s40 = sphi 0, %s39
      %s56 = sphi 0, %s40
      %s64 = sphi 0, %s66
      %s67 = sphi 0, %s64
      %s68 = sphi 0, %s67
      %s84 = sphi 0, %s68
      %s92 = sphi 0, %s94
      %s95 = sphi 0, %s92
      %s96 = sphi 0, %s95
      %s112 = sphi 0, %s96
      %s116 = sphi 0, %s116
      %s118 = sphi 0, %s116
      %s119 = sphi 0, %s118
      %s133 = sphi 0, %s119
      %s141 = sphi 0, %s143
      %s144 = sphi 0, %s141
      %s145 = sphi 0, %s144
      %s161 = sphi 0, %s145
    $region4: #{tpu_custom_call.1} parent=1 // loop_header_branch
      %17 = sbr.rel (%p15) target = $region8
    $region5: #{tpu_custom_call.1} parent=1 // loop_body
      %s19 = ssub.s32 %s14, 1
      %s20 = ssub.s32 %s14, 2
      %s27 = sadd.s32 1, %s22
      %p28 = scmp.ge.s32.totalorder %s27, 1
      %s29 = scalar_select %p28, 0, %s27
      %s30 = sadd.s32 1, %s21
      %s31 = scalar_select %p28, %s30, %s21
      %p32 = scmp.ge.s32.totalorder %s31, 2
      %s33 = scalar_select %p32, 0, %s31
      %s34 = ssub.s32 %s21, %s33
      %p35 = scmp.eq.s32.totalorder %s34, 0
      %s37 = sadd.s32 %s36, 1
      %s38 = scalar_select %p35, %s36, %s37
      %p41 = pneg %p35
      %p42 = scmp.eq.s32.totalorder %s14, 1
      %p43 = por %p41, %p42
      %p44 = scmp.ne.s32.totalorder %s36, %s39
      %p45 = scmp.eq.s32.totalorder %s14, 0
      %p46 = por %p44, %p45
      %p47 = scmp.ne.s32.totalorder %s36, %s39
      %p48 = scmp.eq.s32.totalorder %s19, 1
      %p49 = por %p47, %p48
      %p50 = scmp.ne.s32.totalorder %s39, %s40
      %p51 = scmp.eq.s32.totalorder %s19, 0
      %p52 = por %p50, %p51
      %p53 = scmp.ne.s32.totalorder %s39, %s40
      %p54 = scmp.eq.s32.totalorder %s20, 1
      %p55 = por %p53, %p54
      %p57 = scmp.ne.s32.totalorder %s40, %s56
      %p58 = scmp.eq.s32.totalorder %s20, 0
      %p59 = por %p57, %p58
      %s60 = ssub.s32 %s21, %s33
      %s61 = ssub.s32 %s22, %s29
      %s62 = sor.u32 %s60, %s61
      %p63 = scmp.eq.s32.totalorder %s62, 0
      %s65 = sadd.s32 %s64, 1
      %s66 = scalar_select %p63, %s64, %s65
      %p69 = pneg %p63
      %p70 = scmp.eq.s32.totalorder %s14, 1
      %p71 = por %p69, %p70
      %p72 = scmp.ne.s32.totalorder %s64, %s67
      %p73 = scmp.eq.s32.totalorder %s14, 0
      %p74 = por %p72, %p73
      %p75 = scmp.ne.s32.totalorder %s64, %s67
      %p76 = scmp.eq.s32.totalorder %s19, 1
      %p77 = por %p75, %p76
      %p78 = scmp.ne.s32.totalorder %s67, %s68
      %p79 = scmp.eq.s32.totalorder %s19, 0
      %p80 = por %p78, %p79
      %p81 = scmp.ne.s32.totalorder %s67, %s68
      %p82 = scmp.eq.s32.totalorder %s20, 1
      %p83 = por %p81, %p82
      %p85 = scmp.ne.s32.totalorder %s68, %s84
      %p86 = scmp.eq.s32.totalorder %s20, 0
      %p87 = por %p85, %p86
      %s88 = ssub.s32 %s21, %s33
      %s89 = ssub.s32 %s22, %s29
      %s90 = sor.u32 %s88, %s89
      %p91 = scmp.eq.s32.totalorder %s90, 0
      %s93 = sadd.s32 %s92, 1
      %s94 = scalar_select %p91, %s92, %s93
      %p97 = pneg %p91
      %p98 = scmp.eq.s32.totalorder %s14, 1
      %p99 = por %p97, %p98
      %p100 = scmp.ne.s32.totalorder %s92, %s95
      %p101 = scmp.eq.s32.totalorder %s14, 0
      %p102 = por %p100, %p101
      %p103 = scmp.ne.s32.totalorder %s92, %s95
      %p104 = scmp.eq.s32.totalorder %s19, 1
      %p105 = por %p103, %p104
      %p106 = scmp.ne.s32.totalorder %s95, %s96
      %p107 = scmp.eq.s32.totalorder %s19, 0
      %p108 = por %p106, %p107
      %p109 = scmp.ne.s32.totalorder %s95, %s96
      %p110 = scmp.eq.s32.totalorder %s20, 1
      %p111 = por %p109, %p110
      %p113 = scmp.ne.s32.totalorder %s96, %s112
      %p114 = scmp.eq.s32.totalorder %s20, 0
      %p115 = por %p113, %p114
      %s117 = sadd.s32 %s116, 1
      %p120 = scmp.eq.s32.totalorder %s14, 1
      %p121 = scmp.ne.s32.totalorder %s116, %s118
      %p122 = scmp.eq.s32.totalorder %s14, 0
      %p123 = por %p121, %p122
      %p124 = scmp.ne.s32.totalorder %s116, %s118
      %p125 = scmp.eq.s32.totalorder %s19, 1
      %p126 = por %p124, %p125
      %p127 = scmp.ne.s32.totalorder %s118, %s119
      %p128 = scmp.eq.s32.totalorder %s19, 0
      %p129 = por %p127, %p128
      %p130 = scmp.ne.s32.totalorder %s118, %s119
      %p131 = scmp.eq.s32.totalorder %s20, 1
      %p132 = por %p130, %p131
      %p134 = scmp.ne.s32.totalorder %s119, %s133
      %p135 = scmp.eq.s32.totalorder %s20, 0
      %p136 = por %p134, %p135
      %s137 = ssub.s32 %s21, %s33
      %s138 = ssub.s32 %s22, %s29
      %s139 = sor.u32 %s137, %s138
      %p140 = scmp.eq.s32.totalorder %s139, 0
      %s142 = sadd.s32 %s141, 1
      %s143 = scalar_select %p140, %s141, %s142
      %p146 = pneg %p140
      %p147 = scmp.eq.s32.totalorder %s14, 1
      %p148 = por %p146, %p147
      %p149 = scmp.ne.s32.totalorder %s141, %s144
      %p150 = scmp.eq.s32.totalorder %s14, 0
      %p151 = por %p149, %p150
      %p152 = scmp.ne.s32.totalorder %s141, %s144
      %p153 = scmp.eq.s32.totalorder %s19, 1
      %p154 = por %p152, %p153
      %p155 = scmp.ne.s32.totalorder %s144, %s145
      %p156 = scmp.eq.s32.totalorder %s19, 0
      %p157 = por %p155, %p156
      %p158 = scmp.ne.s32.totalorder %s144, %s145
      %p159 = scmp.eq.s32.totalorder %s20, 1
      %p160 = por %p158, %p159
      %p162 = scmp.ne.s32.totalorder %s145, %s161
      %p163 = scmp.eq.s32.totalorder %s20, 0
      %p164 = por %p162, %p163
      %p165 = scmp.le.s32.totalorder 1, %s14
      %p166 = scmp.lt.s32.totalorder %s14, 3
      %p167 = pnand %p165, %p166
      %p168 = pneg %p167
      // Predicated region
      $region9: #{tpu_custom_call.1} parent=5 // pred_check
        _
      $region10: #{tpu_custom_call.1} parent=5 // pred_check_branch
        %170 = sbr.rel (%p167) target = $region12
      $region11: #{tpu_custom_call.1} parent=5 // pred_region
        %s171 = ssub.s32 %s14, 1
        // Predicated region
        $region13: #{tpu_custom_call.1} parent=11 // pred_check
          %p172 = pneg %p129
        $region14: #{tpu_custom_call.1} parent=11 // pred_check_branch
          %174 = sbr.rel (%p172) target = $region16
        $region15: #{tpu_custom_call.1} parent=11 // pred_region
          _
        $region16: #{tpu_custom_call.1} parent=11 // pred_fallthru
          _
      $region12: #{tpu_custom_call.1} parent=5 // pred_fallthru
        _
      %p175 = scmp.lt.s32.totalorder %s14, 2
      // Predicated region
      $region17: #{tpu_custom_call.1} parent=5 // pred_check
        %p176 = pneg %p175
      $region18: #{tpu_custom_call.1} parent=5 // pred_check_branch
        %178 = sbr.rel (%p176) target = $region20
      $region19: #{tpu_custom_call.1} parent=5 // pred_region
        // Predicated region
        $region21: #{tpu_custom_call.1} parent=19 // pred_check
          %p179 = pneg %p46
        $region22: #{tpu_custom_call.1} parent=19 // pred_check_branch
          %181 = sbr.rel (%p179) target = $region24
        $region23: #{tpu_custom_call.1} parent=19 // pred_region
          %p182 = scmp.lt.s32.totalorder %s21, 1
          %s183 = scalar_select %p182, %s21, 1
          %s184 = scalar_lea.vmem %s0, %s183
        $region24: #{tpu_custom_call.1} parent=19 // pred_fallthru
          _
        // Predicated region
        $region25: #{tpu_custom_call.1} parent=19 // pred_check
          %p185 = pneg %p74
        $region26: #{tpu_custom_call.1} parent=19 // pred_check_branch
          %187 = sbr.rel (%p185) target = $region28
        $region27: #{tpu_custom_call.1} parent=19 // pred_region
          %s188 = smul.u32 256, %s22
          %p189 = scmp.lt.s32.totalorder %s21, 1
          %s190 = scalar_select %p189, %s21, 1
          %p191 = scmp.lt.s32.totalorder %s188, 255
          %s192 = scalar_select %p191, %s188, 255
          %s193 = smul.addr %s190, 256
          %s194 = sadd.s32 %s192, %s193
          %s195 = smul.addr %s194, 8
          %s196 = scalar_lea.vmem %s1, %s195
          %s197 = smul.u32 256, %s22
        $region28: #{tpu_custom_call.1} parent=19 // pred_fallthru
          _
        // Predicated region
        $region29: #{tpu_custom_call.1} parent=19 // pred_check
          %p198 = pneg %p102
        $region30: #{tpu_custom_call.1} parent=19 // pred_check_branch
          %200 = sbr.rel (%p198) target = $region32
        $region31: #{tpu_custom_call.1} parent=19 // pred_region
          %s201 = smul.u32 256, %s22
          %p202 = scmp.lt.s32.totalorder %s21, 1
          %s203 = scalar_select %p202, %s21, 1
          %p204 = scmp.lt.s32.totalorder %s201, 255
          %s205 = scalar_select %p204, %s201, 255
          %s206 = smul.addr %s203, 256
          %s207 = sadd.s32 %s205, %s206
          %s208 = smul.addr %s207, 8
          %s209 = scalar_lea.vmem %s2, %s208
          %s210 = smul.u32 256, %s22
        $region32: #{tpu_custom_call.1} parent=19 // pred_fallthru
          _
      $region20: #{tpu_custom_call.1} parent=5 // pred_fallthru
        _
      %p211 = scmp.le.s32.totalorder 1, %s14
      %p212 = scmp.lt.s32.totalorder %s14, 3
      %p213 = pnand %p211, %p212
      %p214 = pneg %p213
      // Predicated region
      $region33: #{tpu_custom_call.1} parent=5 // pred_check
        _
      $region34: #{tpu_custom_call.1} parent=5 // pred_check_branch
        %216 = sbr.rel (%p213) target = $region36
      $region35: #{tpu_custom_call.1} parent=5 // pred_region
        %s217 = ssub.s32 %s14, 1
        %p218 = scmp.lt.s32.totalorder %s23, 1
        %s219 = scalar_select %p218, %s23, 1
        %s220 = scalar_lea.vmem %s0, %s219
        %p221 = pneg %p52
        %p222 = pneg %p49
        %s223 = smul.u32 256, %s24
        %p224 = scmp.lt.s32.totalorder %s23, 1
        %s225 = scalar_select %p224, %s23, 1
        %p226 = scmp.lt.s32.totalorder %s223, 255
        %s227 = scalar_select %p226, %s223, 255
        %s228 = smul.addr %s225, 256
        %s229 = sadd.s32 %s227, %s228
        %s230 = smul.addr %s229, 8
        %s231 = scalar_lea.vmem %s1, %s230
        %p232 = pneg %p80
        %p233 = pneg %p77
        %s234 = smul.u32 256, %s24
        %p235 = scmp.lt.s32.totalorder %s23, 1
        %s236 = scalar_select %p235, %s23, 1
        %p237 = scmp.lt.s32.totalorder %s234, 255
        %s238 = scalar_select %p237, %s234, 255
        %s239 = smul.addr %s236, 256
        %s240 = sadd.s32 %s238, %s239
        %s241 = smul.addr %s240, 8
        %s242 = scalar_lea.vmem %s2, %s241
        %p243 = pneg %p108
        %p244 = pneg %p105
        %p245 = pneg %p129
        %p246 = pneg %p126
        %p247 = pneg %p157
        %p248 = pneg %p154
        %s249 = sand.u32 %s144, 1
        %s250 = scalar_lea.sflag [#allocation4], %s249
        %s251 = sand.u32 %s144, 1
        %s252 = smul.addr %s251, 32
        %s253 = scalar_lea.vmem [#allocation3], %s252
        %p254 = scmp.lt.s32.totalorder %s23, 1
        %s255 = scalar_select %p254, %s23, 1
        %s256 = scalar_lea.vmem %s0, %s255
        %s257 = smul.u32 256, %s24
        %p258 = scmp.lt.s32.totalorder %s23, 1
        %s259 = scalar_select %p258, %s23, 1
        %p260 = scmp.lt.s32.totalorder %s257, 255
        %s261 = scalar_select %p260, %s257, 255
        %s262 = smul.addr %s259, 256
        %s263 = sadd.s32 %s261, %s262
        %s264 = smul.addr %s263, 8
        %s265 = scalar_lea.vmem %s1, %s264
        %s266 = smul.u32 256, %s24
        %s267 = smul.u32 256, %s24
        %p268 = scmp.lt.s32.totalorder %s23, 1
        %s269 = scalar_select %p268, %s23, 1
        %p270 = scmp.lt.s32.totalorder %s267, 255
        %s271 = scalar_select %p270, %s267, 255
        %s272 = smul.addr %s269, 256
        %s273 = sadd.s32 %s271, %s272
        %s274 = smul.addr %s273, 8
        %s275 = scalar_lea.vmem %s2, %s274
        %s276 = smul.u32 256, %s24
        %s277 = smul.u32 16, %s24
        %v278 = vld [vmem:[%s256] sm:$0x1]
        %v279 = vld [vmem:[%s265] sm:$0xff]
        %v280 = vld [vmem:[%s265 + $0x8] sm:$0xff]
        %v281 = vld [vmem:[%s265 + $0x10] sm:$0xff]
        %v282 = vld [vmem:[%s265 + $0x18] sm:$0xff]
        %v283 = vld [vmem:[%s265 + $0x20] sm:$0xff]
        %v284 = vld [vmem:[%s265 + $0x28] sm:$0xff]
        %v285 = vld [vmem:[%s265 + $0x30] sm:$0xff]
        %v286 = vld [vmem:[%s265 + $0x38] sm:$0xff]
        %v287 = vld [vmem:[%s265 + $0x40] sm:$0xff]
        %v288 = vld [vmem:[%s265 + $0x48] sm:$0xff]
        %v289 = vld [vmem:[%s265 + $0x50] sm:$0xff]
        %v290 = vld [vmem:[%s265 + $0x58] sm:$0xff]
        %v291 = vld [vmem:[%s265 + $0x60] sm:$0xff]
        %v292 = vld [vmem:[%s265 + $0x68] sm:$0xff]
        %v293 = vld [vmem:[%s265 + $0x70] sm:$0xff]
        %v294 = vld [vmem:[%s265 + $0x78] sm:$0xff]
        %v295 = vld [vmem:[%s265 + $0x80] sm:$0xff]
        %v296 = vld [vmem:[%s265 + $0x88] sm:$0xff]
        %v297 = vld [vmem:[%s265 + $0x90] sm:$0xff]
        %v298 = vld [vmem:[%s265 + $0x98] sm:$0xff]
        %v299 = vld [vmem:[%s265 + $0xa0] sm:$0xff]
        %v300 = vld [vmem:[%s265 + $0xa8] sm:$0xff]
        %v301 = vld [vmem:[%s265 + $0xb0] sm:$0xff]
        %v302 = vld [vmem:[%s265 + $0xb8] sm:$0xff]
        %v303 = vld [vmem:[%s265 + $0xc0] sm:$0xff]
        %v304 = vld [vmem:[%s265 + $0xc8] sm:$0xff]
        %v305 = vld [vmem:[%s265 + $0xd0] sm:$0xff]
        %v306 = vld [vmem:[%s265 + $0xd8] sm:$0xff]
        %v307 = vld [vmem:[%s265 + $0xe0] sm:$0xff]
        %v308 = vld [vmem:[%s265 + $0xe8] sm:$0xff]
        %v309 = vld [vmem:[%s265 + $0xf0] sm:$0xff]
        %v310 = vld [vmem:[%s265 + $0xf8] sm:$0xff]
        %v311 = vld [vmem:[%s265 + $0x100] sm:$0xff]
        %v312 = vld [vmem:[%s265 + $0x108] sm:$0xff]
        %v313 = vld [vmem:[%s265 + $0x110] sm:$0xff]
        %v314 = vld [vmem:[%s265 + $0x118] sm:$0xff]
        %v315 = vld [vmem:[%s265 + $0x120] sm:$0xff]
        %v316 = vld [vmem:[%s265 + $0x128] sm:$0xff]
        %v317 = vld [vmem:[%s265 + $0x130] sm:$0xff]
        %v318 = vld [vmem:[%s265 + $0x138] sm:$0xff]
        %v319 = vld [vmem:[%s265 + $0x140] sm:$0xff]
        %v320 = vld [vmem:[%s265 + $0x148] sm:$0xff]
        %v321 = vld [vmem:[%s265 + $0x150] sm:$0xff]
        %v322 = vld [vmem:[%s265 + $0x158] sm:$0xff]
        %v323 = vld [vmem:[%s265 + $0x160] sm:$0xff]
        %v324 = vld [vmem:[%s265 + $0x168] sm:$0xff]
        %v325 = vld [vmem:[%s265 + $0x170] sm:$0xff]
        %v326 = vld [vmem:[%s265 + $0x178] sm:$0xff]
        %v327 = vld [vmem:[%s265 + $0x180] sm:$0xff]
        %v328 = vld [vmem:[%s265 + $0x188] sm:$0xff]
        %v329 = vld [vmem:[%s265 + $0x190] sm:$0xff]
        %v330 = vld [vmem:[%s265 + $0x198] sm:$0xff]
        %v331 = vld [vmem:[%s265 + $0x1a0] sm:$0xff]
        %v332 = vld [vmem:[%s265 + $0x1a8] sm:$0xff]
        %v333 = vld [vmem:[%s265 + $0x1b0] sm:$0xff]
        %v334 = vld [vmem:[%s265 + $0x1b8] sm:$0xff]
        %v335 = vld [vmem:[%s265 + $0x1c0] sm:$0xff]
        %v336 = vld [vmem:[%s265 + $0x1c8] sm:$0xff]
        %v337 = vld [vmem:[%s265 + $0x1d0] sm:$0xff]
        %v338 = vld [vmem:[%s265 + $0x1d8] sm:$0xff]
        %v339 = vld [vmem:[%s265 + $0x1e0] sm:$0xff]
        %v340 = vld [vmem:[%s265 + $0x1e8] sm:$0xff]
        %v341 = vld [vmem:[%s265 + $0x1f0] sm:$0xff]
        %v342 = vld [vmem:[%s265 + $0x1f8] sm:$0xff]
        %v343 = vld [vmem:[%s265 + $0x200] sm:$0xff]
        %v344 = vld [vmem:[%s265 + $0x208] sm:$0xff]
        %v345 = vld [vmem:[%s265 + $0x210] sm:$0xff]
        %v346 = vld [vmem:[%s265 + $0x218] sm:$0xff]
        %v347 = vld [vmem:[%s265 + $0x220] sm:$0xff]
        %v348 = vld [vmem:[%s265 + $0x228] sm:$0xff]
        %v349 = vld [vmem:[%s265 + $0x230] sm:$0xff]
        %v350 = vld [vmem:[%s265 + $0x238] sm:$0xff]
        %v351 = vld [vmem:[%s265 + $0x240] sm:$0xff]
        %v352 = vld [vmem:[%s265 + $0x248] sm:$0xff]
        %v353 = vld [vmem:[%s265 + $0x250] sm:$0xff]
        %v354 = vld [vmem:[%s265 + $0x258] sm:$0xff]
        %v355 = vld [vmem:[%s265 + $0x260] sm:$0xff]
        %v356 = vld [vmem:[%s265 + $0x268] sm:$0xff]
        %v357 = vld [vmem:[%s265 + $0x270] sm:$0xff]
        %v358 = vld [vmem:[%s265 + $0x278] sm:$0xff]
        %v359 = vld [vmem:[%s265 + $0x280] sm:$0xff]
        %v360 = vld [vmem:[%s265 + $0x288] sm:$0xff]
        %v361 = vld [vmem:[%s265 + $0x290] sm:$0xff]
        %v362 = vld [vmem:[%s265 + $0x298] sm:$0xff]
        %v363 = vld [vmem:[%s265 + $0x2a0] sm:$0xff]
        %v364 = vld [vmem:[%s265 + $0x2a8] sm:$0xff]
        %v365 = vld [vmem:[%s265 + $0x2b0] sm:$0xff]
        %v366 = vld [vmem:[%s265 + $0x2b8] sm:$0xff]
        %v367 = vld [vmem:[%s265 + $0x2c0] sm:$0xff]
        %v368 = vld [vmem:[%s265 + $0x2c8] sm:$0xff]
        %v369 = vld [vmem:[%s265 + $0x2d0] sm:$0xff]
        %v370 = vld [vmem:[%s265 + $0x2d8] sm:$0xff]
        %v371 = vld [vmem:[%s265 + $0x2e0] sm:$0xff]
        %v372 = vld [vmem:[%s265 + $0x2e8] sm:$0xff]
        %v373 = vld [vmem:[%s265 + $0x2f0] sm:$0xff]
        %v374 = vld [vmem:[%s265 + $0x2f8] sm:$0xff]
        %v375 = vld [vmem:[%s265 + $0x300] sm:$0xff]
        %v376 = vld [vmem:[%s265 + $0x308] sm:$0xff]
        %v377 = vld [vmem:[%s265 + $0x310] sm:$0xff]
        %v378 = vld [vmem:[%s265 + $0x318] sm:$0xff]
        %v379 = vld [vmem:[%s265 + $0x320] sm:$0xff]
        %v380 = vld [vmem:[%s265 + $0x328] sm:$0xff]
        %v381 = vld [vmem:[%s265 + $0x330] sm:$0xff]
        %v382 = vld [vmem:[%s265 + $0x338] sm:$0xff]
        %v383 = vld [vmem:[%s265 + $0x340] sm:$0xff]
        %v384 = vld [vmem:[%s265 + $0x348] sm:$0xff]
        %v385 = vld [vmem:[%s265 + $0x350] sm:$0xff]
        %v386 = vld [vmem:[%s265 + $0x358] sm:$0xff]
        %v387 = vld [vmem:[%s265 + $0x360] sm:$0xff]
        %v388 = vld [vmem:[%s265 + $0x368] sm:$0xff]
        %v389 = vld [vmem:[%s265 + $0x370] sm:$0xff]
        %v390 = vld [vmem:[%s265 + $0x378] sm:$0xff]
        %v391 = vld [vmem:[%s265 + $0x380] sm:$0xff]
        %v392 = vld [vmem:[%s265 + $0x388] sm:$0xff]
        %v393 = vld [vmem:[%s265 + $0x390] sm:$0xff]
        %v394 = vld [vmem:[%s265 + $0x398] sm:$0xff]
        %v395 = vld [vmem:[%s265 + $0x3a0] sm:$0xff]
        %v396 = vld [vmem:[%s265 + $0x3a8] sm:$0xff]
        %v397 = vld [vmem:[%s265 + $0x3b0] sm:$0xff]
        %v398 = vld [vmem:[%s265 + $0x3b8] sm:$0xff]
        %v399 = vld [vmem:[%s265 + $0x3c0] sm:$0xff]
        %v400 = vld [vmem:[%s265 + $0x3c8] sm:$0xff]
        %v401 = vld [vmem:[%s265 + $0x3d0] sm:$0xff]
        %v402 = vld [vmem:[%s265 + $0x3d8] sm:$0xff]
        %v403 = vld [vmem:[%s265 + $0x3e0] sm:$0xff]
        %v404 = vld [vmem:[%s265 + $0x3e8] sm:$0xff]
        %v405 = vld [vmem:[%s265 + $0x3f0] sm:$0xff]
        %v406 = vld [vmem:[%s265 + $0x3f8] sm:$0xff]
        %v407 = vld [vmem:[%s265 + $0x400] sm:$0xff]
        %v408 = vld [vmem:[%s265 + $0x408] sm:$0xff]
        %v409 = vld [vmem:[%s265 + $0x410] sm:$0xff]
        %v410 = vld [vmem:[%s265 + $0x418] sm:$0xff]
        %v411 = vld [vmem:[%s265 + $0x420] sm:$0xff]
        %v412 = vld [vmem:[%s265 + $0x428] sm:$0xff]
        %v413 = vld [vmem:[%s265 + $0x430] sm:$0xff]
        %v414 = vld [vmem:[%s265 + $0x438] sm:$0xff]
        %v415 = vld [vmem:[%s265 + $0x440] sm:$0xff]
        %v416 = vld [vmem:[%s265 + $0x448] sm:$0xff]
        %v417 = vld [vmem:[%s265 + $0x450] sm:$0xff]
        %v418 = vld [vmem:[%s265 + $0x458] sm:$0xff]
        %v419 = vld [vmem:[%s265 + $0x460] sm:$0xff]
        %v420 = vld [vmem:[%s265 + $0x468] sm:$0xff]
        %v421 = vld [vmem:[%s265 + $0x470] sm:$0xff]
        %v422 = vld [vmem:[%s265 + $0x478] sm:$0xff]
        %v423 = vld [vmem:[%s265 + $0x480] sm:$0xff]
        %v424 = vld [vmem:[%s265 + $0x488] sm:$0xff]
        %v425 = vld [vmem:[%s265 + $0x490] sm:$0xff]
        %v426 = vld [vmem:[%s265 + $0x498] sm:$0xff]
        %v427 = vld [vmem:[%s265 + $0x4a0] sm:$0xff]
        %v428 = vld [vmem:[%s265 + $0x4a8] sm:$0xff]
        %v429 = vld [vmem:[%s265 + $0x4b0] sm:$0xff]
        %v430 = vld [vmem:[%s265 + $0x4b8] sm:$0xff]
        %v431 = vld [vmem:[%s265 + $0x4c0] sm:$0xff]
        %v432 = vld [vmem:[%s265 + $0x4c8] sm:$0xff]
        %v433 = vld [vmem:[%s265 + $0x4d0] sm:$0xff]
        %v434 = vld [vmem:[%s265 + $0x4d8] sm:$0xff]
        %v435 = vld [vmem:[%s265 + $0x4e0] sm:$0xff]
        %v436 = vld [vmem:[%s265 + $0x4e8] sm:$0xff]
        %v437 = vld [vmem:[%s265 + $0x4f0] sm:$0xff]
        %v438 = vld [vmem:[%s265 + $0x4f8] sm:$0xff]
        %v439 = vld [vmem:[%s265 + $0x500] sm:$0xff]
        %v440 = vld [vmem:[%s265 + $0x508] sm:$0xff]
        %v441 = vld [vmem:[%s265 + $0x510] sm:$0xff]
        %v442 = vld [vmem:[%s265 + $0x518] sm:$0xff]
        %v443 = vld [vmem:[%s265 + $0x520] sm:$0xff]
        %v444 = vld [vmem:[%s265 + $0x528] sm:$0xff]
        %v445 = vld [vmem:[%s265 + $0x530] sm:$0xff]
        %v446 = vld [vmem:[%s265 + $0x538] sm:$0xff]
        %v447 = vld [vmem:[%s265 + $0x540] sm:$0xff]
        %v448 = vld [vmem:[%s265 + $0x548] sm:$0xff]
        %v449 = vld [vmem:[%s265 + $0x550] sm:$0xff]
        %v450 = vld [vmem:[%s265 + $0x558] sm:$0xff]
        %v451 = vld [vmem:[%s265 + $0x560] sm:$0xff]
        %v452 = vld [vmem:[%s265 + $0x568] sm:$0xff]
        %v453 = vld [vmem:[%s265 + $0x570] sm:$0xff]
        %v454 = vld [vmem:[%s265 + $0x578] sm:$0xff]
        %v455 = vld [vmem:[%s265 + $0x580] sm:$0xff]
        %v456 = vld [vmem:[%s265 + $0x588] sm:$0xff]
        %v457 = vld [vmem:[%s265 + $0x590] sm:$0xff]
        %v458 = vld [vmem:[%s265 + $0x598] sm:$0xff]
        %v459 = vld [vmem:[%s265 + $0x5a0] sm:$0xff]
        %v460 = vld [vmem:[%s265 + $0x5a8] sm:$0xff]
        %v461 = vld [vmem:[%s265 + $0x5b0] sm:$0xff]
        %v462 = vld [vmem:[%s265 + $0x5b8] sm:$0xff]
        %v463 = vld [vmem:[%s265 + $0x5c0] sm:$0xff]
        %v464 = vld [vmem:[%s265 + $0x5c8] sm:$0xff]
        %v465 = vld [vmem:[%s265 + $0x5d0] sm:$0xff]
        %v466 = vld [vmem:[%s265 + $0x5d8] sm:$0xff]
        %v467 = vld [vmem:[%s265 + $0x5e0] sm:$0xff]
        %v468 = vld [vmem:[%s265 + $0x5e8] sm:$0xff]
        %v469 = vld [vmem:[%s265 + $0x5f0] sm:$0xff]
        %v470 = vld [vmem:[%s265 + $0x5f8] sm:$0xff]
        %v471 = vld [vmem:[%s265 + $0x600] sm:$0xff]
        %v472 = vld [vmem:[%s265 + $0x608] sm:$0xff]
        %v473 = vld [vmem:[%s265 + $0x610] sm:$0xff]
        %v474 = vld [vmem:[%s265 + $0x618] sm:$0xff]
        %v475 = vld [vmem:[%s265 + $0x620] sm:$0xff]
        %v476 = vld [vmem:[%s265 + $0x628] sm:$0xff]
        %v477 = vld [vmem:[%s265 + $0x630] sm:$0xff]
        %v478 = vld [vmem:[%s265 + $0x638] sm:$0xff]
        %v479 = vld [vmem:[%s265 + $0x640] sm:$0xff]
        %v480 = vld [vmem:[%s265 + $0x648] sm:$0xff]
        %v481 = vld [vmem:[%s265 + $0x650] sm:$0xff]
        %v482 = vld [vmem:[%s265 + $0x658] sm:$0xff]
        %v483 = vld [vmem:[%s265 + $0x660] sm:$0xff]
        %v484 = vld [vmem:[%s265 + $0x668] sm:$0xff]
        %v485 = vld [vmem:[%s265 + $0x670] sm:$0xff]
        %v486 = vld [vmem:[%s265 + $0x678] sm:$0xff]
        %v487 = vld [vmem:[%s265 + $0x680] sm:$0xff]
        %v488 = vld [vmem:[%s265 + $0x688] sm:$0xff]
        %v489 = vld [vmem:[%s265 + $0x690] sm:$0xff]
        %v490 = vld [vmem:[%s265 + $0x698] sm:$0xff]
        %v491 = vld [vmem:[%s265 + $0x6a0] sm:$0xff]
        %v492 = vld [vmem:[%s265 + $0x6a8] sm:$0xff]
        %v493 = vld [vmem:[%s265 + $0x6b0] sm:$0xff]
        %v494 = vld [vmem:[%s265 + $0x6b8] sm:$0xff]
        %v495 = vld [vmem:[%s265 + $0x6c0] sm:$0xff]
        %v496 = vld [vmem:[%s265 + $0x6c8] sm:$0xff]
        %v497 = vld [vmem:[%s265 + $0x6d0] sm:$0xff]
        %v498 = vld [vmem:[%s265 + $0x6d8] sm:$0xff]
        %v499 = vld [vmem:[%s265 + $0x6e0] sm:$0xff]
        %v500 = vld [vmem:[%s265 + $0x6e8] sm:$0xff]
        %v501 = vld [vmem:[%s265 + $0x6f0] sm:$0xff]
        %v502 = vld [vmem:[%s265 + $0x6f8] sm:$0xff]
        %v503 = vld [vmem:[%s265 + $0x700] sm:$0xff]
        %v504 = vld [vmem:[%s265 + $0x708] sm:$0xff]
        %v505 = vld [vmem:[%s265 + $0x710] sm:$0xff]
        %v506 = vld [vmem:[%s265 + $0x718] sm:$0xff]
        %v507 = vld [vmem:[%s265 + $0x720] sm:$0xff]
        %v508 = vld [vmem:[%s265 + $0x728] sm:$0xff]
        %v509 = vld [vmem:[%s265 + $0x730] sm:$0xff]
        %v510 = vld [vmem:[%s265 + $0x738] sm:$0xff]
        %v511 = vld [vmem:[%s265 + $0x740] sm:$0xff]
        %v512 = vld [vmem:[%s265 + $0x748] sm:$0xff]
        %v513 = vld [vmem:[%s265 + $0x750] sm:$0xff]
        %v514 = vld [vmem:[%s265 + $0x758] sm:$0xff]
        %v515 = vld [vmem:[%s265 + $0x760] sm:$0xff]
        %v516 = vld [vmem:[%s265 + $0x768] sm:$0xff]
        %v517 = vld [vmem:[%s265 + $0x770] sm:$0xff]
        %v518 = vld [vmem:[%s265 + $0x778] sm:$0xff]
        %v519 = vld [vmem:[%s265 + $0x780] sm:$0xff]
        %v520 = vld [vmem:[%s265 + $0x788] sm:$0xff]
        %v521 = vld [vmem:[%s265 + $0x790] sm:$0xff]
        %v522 = vld [vmem:[%s265 + $0x798] sm:$0xff]
        %v523 = vld [vmem:[%s265 + $0x7a0] sm:$0xff]
        %v524 = vld [vmem:[%s265 + $0x7a8] sm:$0xff]
        %v525 = vld [vmem:[%s265 + $0x7b0] sm:$0xff]
        %v526 = vld [vmem:[%s265 + $0x7b8] sm:$0xff]
        %v527 = vld [vmem:[%s265 + $0x7c0] sm:$0xff]
        %v528 = vld [vmem:[%s265 + $0x7c8] sm:$0xff]
        %v529 = vld [vmem:[%s265 + $0x7d0] sm:$0xff]
        %v530 = vld [vmem:[%s265 + $0x7d8] sm:$0xff]
        %v531 = vld [vmem:[%s265 + $0x7e0] sm:$0xff]
        %v532 = vld [vmem:[%s265 + $0x7e8] sm:$0xff]
        %v533 = vld [vmem:[%s265 + $0x7f0] sm:$0xff]
        %v534 = vld [vmem:[%s265 + $0x7f8] sm:$0xff]
        %v535 = vld [vmem:[%s275] sm:$0xff]
        %v536 = vld [vmem:[%s275 + $0x8] sm:$0xff]
        %v537 = vld [vmem:[%s275 + $0x10] sm:$0xff]
        %v538 = vld [vmem:[%s275 + $0x18] sm:$0xff]
        %v539 = vld [vmem:[%s275 + $0x20] sm:$0xff]
        %v540 = vld [vmem:[%s275 + $0x28] sm:$0xff]
        %v541 = vld [vmem:[%s275 + $0x30] sm:$0xff]
        %v542 = vld [vmem:[%s275 + $0x38] sm:$0xff]
        %v543 = vld [vmem:[%s275 + $0x40] sm:$0xff]
        %v544 = vld [vmem:[%s275 + $0x48] sm:$0xff]
        %v545 = vld [vmem:[%s275 + $0x50] sm:$0xff]
        %v546 = vld [vmem:[%s275 + $0x58] sm:$0xff]
        %v547 = vld [vmem:[%s275 + $0x60] sm:$0xff]
        %v548 = vld [vmem:[%s275 + $0x68] sm:$0xff]
        %v549 = vld [vmem:[%s275 + $0x70] sm:$0xff]
        %v550 = vld [vmem:[%s275 + $0x78] sm:$0xff]
        %v551 = vld [vmem:[%s275 + $0x80] sm:$0xff]
        %v552 = vld [vmem:[%s275 + $0x88] sm:$0xff]
        %v553 = vld [vmem:[%s275 + $0x90] sm:$0xff]
        %v554 = vld [vmem:[%s275 + $0x98] sm:$0xff]
        %v555 = vld [vmem:[%s275 + $0xa0] sm:$0xff]
        %v556 = vld [vmem:[%s275 + $0xa8] sm:$0xff]
        %v557 = vld [vmem:[%s275 + $0xb0] sm:$0xff]
        %v558 = vld [vmem:[%s275 + $0xb8] sm:$0xff]
        %v559 = vld [vmem:[%s275 + $0xc0] sm:$0xff]
        %v560 = vld [vmem:[%s275 + $0xc8] sm:$0xff]
        %v561 = vld [vmem:[%s275 + $0xd0] sm:$0xff]
        %v562 = vld [vmem:[%s275 + $0xd8] sm:$0xff]
        %v563 = vld [vmem:[%s275 + $0xe0] sm:$0xff]
        %v564 = vld [vmem:[%s275 + $0xe8] sm:$0xff]
        %v565 = vld [vmem:[%s275 + $0xf0] sm:$0xff]
        %v566 = vld [vmem:[%s275 + $0xf8] sm:$0xff]
        %v567 = vld [vmem:[%s275 + $0x100] sm:$0xff]
        %v568 = vld [vmem:[%s275 + $0x108] sm:$0xff]
        %v569 = vld [vmem:[%s275 + $0x110] sm:$0xff]
        %v570 = vld [vmem:[%s275 + $0x118] sm:$0xff]
        %v571 = vld [vmem:[%s275 + $0x120] sm:$0xff]
        %v572 = vld [vmem:[%s275 + $0x128] sm:$0xff]
        %v573 = vld [vmem:[%s275 + $0x130] sm:$0xff]
        %v574 = vld [vmem:[%s275 + $0x138] sm:$0xff]
        %v575 = vld [vmem:[%s275 + $0x140] sm:$0xff]
        %v576 = vld [vmem:[%s275 + $0x148] sm:$0xff]
        %v577 = vld [vmem:[%s275 + $0x150] sm:$0xff]
        %v578 = vld [vmem:[%s275 + $0x158] sm:$0xff]
        %v579 = vld [vmem:[%s275 + $0x160] sm:$0xff]
        %v580 = vld [vmem:[%s275 + $0x168] sm:$0xff]
        %v581 = vld [vmem:[%s275 + $0x170] sm:$0xff]
        %v582 = vld [vmem:[%s275 + $0x178] sm:$0xff]
        %v583 = vld [vmem:[%s275 + $0x180] sm:$0xff]
        %v584 = vld [vmem:[%s275 + $0x188] sm:$0xff]
        %v585 = vld [vmem:[%s275 + $0x190] sm:$0xff]
        %v586 = vld [vmem:[%s275 + $0x198] sm:$0xff]
        %v587 = vld [vmem:[%s275 + $0x1a0] sm:$0xff]
        %v588 = vld [vmem:[%s275 + $0x1a8] sm:$0xff]
        %v589 = vld [vmem:[%s275 + $0x1b0] sm:$0xff]
        %v590 = vld [vmem:[%s275 + $0x1b8] sm:$0xff]
        %v591 = vld [vmem:[%s275 + $0x1c0] sm:$0xff]
        %v592 = vld [vmem:[%s275 + $0x1c8] sm:$0xff]
        %v593 = vld [vmem:[%s275 + $0x1d0] sm:$0xff]
        %v594 = vld [vmem:[%s275 + $0x1d8] sm:$0xff]
        %v595 = vld [vmem:[%s275 + $0x1e0] sm:$0xff]
        %v596 = vld [vmem:[%s275 + $0x1e8] sm:$0xff]
        %v597 = vld [vmem:[%s275 + $0x1f0] sm:$0xff]
        %v598 = vld [vmem:[%s275 + $0x1f8] sm:$0xff]
        %v599 = vld [vmem:[%s275 + $0x200] sm:$0xff]
        %v600 = vld [vmem:[%s275 + $0x208] sm:$0xff]
        %v601 = vld [vmem:[%s275 + $0x210] sm:$0xff]
        %v602 = vld [vmem:[%s275 + $0x218] sm:$0xff]
        %v603 = vld [vmem:[%s275 + $0x220] sm:$0xff]
        %v604 = vld [vmem:[%s275 + $0x228] sm:$0xff]
        %v605 = vld [vmem:[%s275 + $0x230] sm:$0xff]
        %v606 = vld [vmem:[%s275 + $0x238] sm:$0xff]
        %v607 = vld [vmem:[%s275 + $0x240] sm:$0xff]
        %v608 = vld [vmem:[%s275 + $0x248] sm:$0xff]
        %v609 = vld [vmem:[%s275 + $0x250] sm:$0xff]
        %v610 = vld [vmem:[%s275 + $0x258] sm:$0xff]
        %v611 = vld [vmem:[%s275 + $0x260] sm:$0xff]
        %v612 = vld [vmem:[%s275 + $0x268] sm:$0xff]
        %v613 = vld [vmem:[%s275 + $0x270] sm:$0xff]
        %v614 = vld [vmem:[%s275 + $0x278] sm:$0xff]
        %v615 = vld [vmem:[%s275 + $0x280] sm:$0xff]
        %v616 = vld [vmem:[%s275 + $0x288] sm:$0xff]
        %v617 = vld [vmem:[%s275 + $0x290] sm:$0xff]
        %v618 = vld [vmem:[%s275 + $0x298] sm:$0xff]
        %v619 = vld [vmem:[%s275 + $0x2a0] sm:$0xff]
        %v620 = vld [vmem:[%s275 + $0x2a8] sm:$0xff]
        %v621 = vld [vmem:[%s275 + $0x2b0] sm:$0xff]
        %v622 = vld [vmem:[%s275 + $0x2b8] sm:$0xff]
        %v623 = vld [vmem:[%s275 + $0x2c0] sm:$0xff]
        %v624 = vld [vmem:[%s275 + $0x2c8] sm:$0xff]
        %v625 = vld [vmem:[%s275 + $0x2d0] sm:$0xff]
        %v626 = vld [vmem:[%s275 + $0x2d8] sm:$0xff]
        %v627 = vld [vmem:[%s275 + $0x2e0] sm:$0xff]
        %v628 = vld [vmem:[%s275 + $0x2e8] sm:$0xff]
        %v629 = vld [vmem:[%s275 + $0x2f0] sm:$0xff]
        %v630 = vld [vmem:[%s275 + $0x2f8] sm:$0xff]
        %v631 = vld [vmem:[%s275 + $0x300] sm:$0xff]
        %v632 = vld [vmem:[%s275 + $0x308] sm:$0xff]
        %v633 = vld [vmem:[%s275 + $0x310] sm:$0xff]
        %v634 = vld [vmem:[%s275 + $0x318] sm:$0xff]
        %v635 = vld [vmem:[%s275 + $0x320] sm:$0xff]
        %v636 = vld [vmem:[%s275 + $0x328] sm:$0xff]
        %v637 = vld [vmem:[%s275 + $0x330] sm:$0xff]
        %v638 = vld [vmem:[%s275 + $0x338] sm:$0xff]
        %v639 = vld [vmem:[%s275 + $0x340] sm:$0xff]
        %v640 = vld [vmem:[%s275 + $0x348] sm:$0xff]
        %v641 = vld [vmem:[%s275 + $0x350] sm:$0xff]
        %v642 = vld [vmem:[%s275 + $0x358] sm:$0xff]
        %v643 = vld [vmem:[%s275 + $0x360] sm:$0xff]
        %v644 = vld [vmem:[%s275 + $0x368] sm:$0xff]
        %v645 = vld [vmem:[%s275 + $0x370] sm:$0xff]
        %v646 = vld [vmem:[%s275 + $0x378] sm:$0xff]
        %v647 = vld [vmem:[%s275 + $0x380] sm:$0xff]
        %v648 = vld [vmem:[%s275 + $0x388] sm:$0xff]
        %v649 = vld [vmem:[%s275 + $0x390] sm:$0xff]
        %v650 = vld [vmem:[%s275 + $0x398] sm:$0xff]
        %v651 = vld [vmem:[%s275 + $0x3a0] sm:$0xff]
        %v652 = vld [vmem:[%s275 + $0x3a8] sm:$0xff]
        %v653 = vld [vmem:[%s275 + $0x3b0] sm:$0xff]
        %v654 = vld [vmem:[%s275 + $0x3b8] sm:$0xff]
        %v655 = vld [vmem:[%s275 + $0x3c0] sm:$0xff]
        %v656 = vld [vmem:[%s275 + $0x3c8] sm:$0xff]
        %v657 = vld [vmem:[%s275 + $0x3d0] sm:$0xff]
        %v658 = vld [vmem:[%s275 + $0x3d8] sm:$0xff]
        %v659 = vld [vmem:[%s275 + $0x3e0] sm:$0xff]
        %v660 = vld [vmem:[%s275 + $0x3e8] sm:$0xff]
        %v661 = vld [vmem:[%s275 + $0x3f0] sm:$0xff]
        %v662 = vld [vmem:[%s275 + $0x3f8] sm:$0xff]
        %v663 = vld [vmem:[%s275 + $0x400] sm:$0xff]
        %v664 = vld [vmem:[%s275 + $0x408] sm:$0xff]
        %v665 = vld [vmem:[%s275 + $0x410] sm:$0xff]
        %v666 = vld [vmem:[%s275 + $0x418] sm:$0xff]
        %v667 = vld [vmem:[%s275 + $0x420] sm:$0xff]
        %v668 = vld [vmem:[%s275 + $0x428] sm:$0xff]
        %v669 = vld [vmem:[%s275 + $0x430] sm:$0xff]
        %v670 = vld [vmem:[%s275 + $0x438] sm:$0xff]
        %v671 = vld [vmem:[%s275 + $0x440] sm:$0xff]
        %v672 = vld [vmem:[%s275 + $0x448] sm:$0xff]
        %v673 = vld [vmem:[%s275 + $0x450] sm:$0xff]
        %v674 = vld [vmem:[%s275 + $0x458] sm:$0xff]
        %v675 = vld [vmem:[%s275 + $0x460] sm:$0xff]
        %v676 = vld [vmem:[%s275 + $0x468] sm:$0xff]
        %v677 = vld [vmem:[%s275 + $0x470] sm:$0xff]
        %v678 = vld [vmem:[%s275 + $0x478] sm:$0xff]
        %v679 = vld [vmem:[%s275 + $0x480] sm:$0xff]
        %v680 = vld [vmem:[%s275 + $0x488] sm:$0xff]
        %v681 = vld [vmem:[%s275 + $0x490] sm:$0xff]
        %v682 = vld [vmem:[%s275 + $0x498] sm:$0xff]
        %v683 = vld [vmem:[%s275 + $0x4a0] sm:$0xff]
        %v684 = vld [vmem:[%s275 + $0x4a8] sm:$0xff]
        %v685 = vld [vmem:[%s275 + $0x4b0] sm:$0xff]
        %v686 = vld [vmem:[%s275 + $0x4b8] sm:$0xff]
        %v687 = vld [vmem:[%s275 + $0x4c0] sm:$0xff]
        %v688 = vld [vmem:[%s275 + $0x4c8] sm:$0xff]
        %v689 = vld [vmem:[%s275 + $0x4d0] sm:$0xff]
        %v690 = vld [vmem:[%s275 + $0x4d8] sm:$0xff]
        %v691 = vld [vmem:[%s275 + $0x4e0] sm:$0xff]
        %v692 = vld [vmem:[%s275 + $0x4e8] sm:$0xff]
        %v693 = vld [vmem:[%s275 + $0x4f0] sm:$0xff]
        %v694 = vld [vmem:[%s275 + $0x4f8] sm:$0xff]
        %v695 = vld [vmem:[%s275 + $0x500] sm:$0xff]
        %v696 = vld [vmem:[%s275 + $0x508] sm:$0xff]
        %v697 = vld [vmem:[%s275 + $0x510] sm:$0xff]
        %v698 = vld [vmem:[%s275 + $0x518] sm:$0xff]
        %v699 = vld [vmem:[%s275 + $0x520] sm:$0xff]
        %v700 = vld [vmem:[%s275 + $0x528] sm:$0xff]
        %v701 = vld [vmem:[%s275 + $0x530] sm:$0xff]
        %v702 = vld [vmem:[%s275 + $0x538] sm:$0xff]
        %v703 = vld [vmem:[%s275 + $0x540] sm:$0xff]
        %v704 = vld [vmem:[%s275 + $0x548] sm:$0xff]
        %v705 = vld [vmem:[%s275 + $0x550] sm:$0xff]
        %v706 = vld [vmem:[%s275 + $0x558] sm:$0xff]
        %v707 = vld [vmem:[%s275 + $0x560] sm:$0xff]
        %v708 = vld [vmem:[%s275 + $0x568] sm:$0xff]
        %v709 = vld [vmem:[%s275 + $0x570] sm:$0xff]
        %v710 = vld [vmem:[%s275 + $0x578] sm:$0xff]
        %v711 = vld [vmem:[%s275 + $0x580] sm:$0xff]
        %v712 = vld [vmem:[%s275 + $0x588] sm:$0xff]
        %v713 = vld [vmem:[%s275 + $0x590] sm:$0xff]
        %v714 = vld [vmem:[%s275 + $0x598] sm:$0xff]
        %v715 = vld [vmem:[%s275 + $0x5a0] sm:$0xff]
        %v716 = vld [vmem:[%s275 + $0x5a8] sm:$0xff]
        %v717 = vld [vmem:[%s275 + $0x5b0] sm:$0xff]
        %v718 = vld [vmem:[%s275 + $0x5b8] sm:$0xff]
        %v719 = vld [vmem:[%s275 + $0x5c0] sm:$0xff]
        %v720 = vld [vmem:[%s275 + $0x5c8] sm:$0xff]
        %v721 = vld [vmem:[%s275 + $0x5d0] sm:$0xff]
        %v722 = vld [vmem:[%s275 + $0x5d8] sm:$0xff]
        %v723 = vld [vmem:[%s275 + $0x5e0] sm:$0xff]
        %v724 = vld [vmem:[%s275 + $0x5e8] sm:$0xff]
        %v725 = vld [vmem:[%s275 + $0x5f0] sm:$0xff]
        %v726 = vld [vmem:[%s275 + $0x5f8] sm:$0xff]
        %v727 = vld [vmem:[%s275 + $0x600] sm:$0xff]
        %v728 = vld [vmem:[%s275 + $0x608] sm:$0xff]
        %v729 = vld [vmem:[%s275 + $0x610] sm:$0xff]
        %v730 = vld [vmem:[%s275 + $0x618] sm:$0xff]
        %v731 = vld [vmem:[%s275 + $0x620] sm:$0xff]
        %v732 = vld [vmem:[%s275 + $0x628] sm:$0xff]
        %v733 = vld [vmem:[%s275 + $0x630] sm:$0xff]
        %v734 = vld [vmem:[%s275 + $0x638] sm:$0xff]
        %v735 = vld [vmem:[%s275 + $0x640] sm:$0xff]
        %v736 = vld [vmem:[%s275 + $0x648] sm:$0xff]
        %v737 = vld [vmem:[%s275 + $0x650] sm:$0xff]
        %v738 = vld [vmem:[%s275 + $0x658] sm:$0xff]
        %v739 = vld [vmem:[%s275 + $0x660] sm:$0xff]
        %v740 = vld [vmem:[%s275 + $0x668] sm:$0xff]
        %v741 = vld [vmem:[%s275 + $0x670] sm:$0xff]
        %v742 = vld [vmem:[%s275 + $0x678] sm:$0xff]
        %v743 = vld [vmem:[%s275 + $0x680] sm:$0xff]
        %v744 = vld [vmem:[%s275 + $0x688] sm:$0xff]
        %v745 = vld [vmem:[%s275 + $0x690] sm:$0xff]
        %v746 = vld [vmem:[%s275 + $0x698] sm:$0xff]
        %v747 = vld [vmem:[%s275 + $0x6a0] sm:$0xff]
        %v748 = vld [vmem:[%s275 + $0x6a8] sm:$0xff]
        %v749 = vld [vmem:[%s275 + $0x6b0] sm:$0xff]
        %v750 = vld [vmem:[%s275 + $0x6b8] sm:$0xff]
        %v751 = vld [vmem:[%s275 + $0x6c0] sm:$0xff]
        %v752 = vld [vmem:[%s275 + $0x6c8] sm:$0xff]
        %v753 = vld [vmem:[%s275 + $0x6d0] sm:$0xff]
        %v754 = vld [vmem:[%s275 + $0x6d8] sm:$0xff]
        %v755 = vld [vmem:[%s275 + $0x6e0] sm:$0xff]
        %v756 = vld [vmem:[%s275 + $0x6e8] sm:$0xff]
        %v757 = vld [vmem:[%s275 + $0x6f0] sm:$0xff]
        %v758 = vld [vmem:[%s275 + $0x6f8] sm:$0xff]
        %v759 = vld [vmem:[%s275 + $0x700] sm:$0xff]
        %v760 = vld [vmem:[%s275 + $0x708] sm:$0xff]
        %v761 = vld [vmem:[%s275 + $0x710] sm:$0xff]
        %v762 = vld [vmem:[%s275 + $0x718] sm:$0xff]
        %v763 = vld [vmem:[%s275 + $0x720] sm:$0xff]
        %v764 = vld [vmem:[%s275 + $0x728] sm:$0xff]
        %v765 = vld [vmem:[%s275 + $0x730] sm:$0xff]
        %v766 = vld [vmem:[%s275 + $0x738] sm:$0xff]
        %v767 = vld [vmem:[%s275 + $0x740] sm:$0xff]
        %v768 = vld [vmem:[%s275 + $0x748] sm:$0xff]
        %v769 = vld [vmem:[%s275 + $0x750] sm:$0xff]
        %v770 = vld [vmem:[%s275 + $0x758] sm:$0xff]
        %v771 = vld [vmem:[%s275 + $0x760] sm:$0xff]
        %v772 = vld [vmem:[%s275 + $0x768] sm:$0xff]
        %v773 = vld [vmem:[%s275 + $0x770] sm:$0xff]
        %v774 = vld [vmem:[%s275 + $0x778] sm:$0xff]
        %v775 = vld [vmem:[%s275 + $0x780] sm:$0xff]
        %v776 = vld [vmem:[%s275 + $0x788] sm:$0xff]
        %v777 = vld [vmem:[%s275 + $0x790] sm:$0xff]
        %v778 = vld [vmem:[%s275 + $0x798] sm:$0xff]
        %v779 = vld [vmem:[%s275 + $0x7a0] sm:$0xff]
        %v780 = vld [vmem:[%s275 + $0x7a8] sm:$0xff]
        %v781 = vld [vmem:[%s275 + $0x7b0] sm:$0xff]
        %v782 = vld [vmem:[%s275 + $0x7b8] sm:$0xff]
        %v783 = vld [vmem:[%s275 + $0x7c0] sm:$0xff]
        %v784 = vld [vmem:[%s275 + $0x7c8] sm:$0xff]
        %v785 = vld [vmem:[%s275 + $0x7d0] sm:$0xff]
        %v786 = vld [vmem:[%s275 + $0x7d8] sm:$0xff]
        %v787 = vld [vmem:[%s275 + $0x7e0] sm:$0xff]
        %v788 = vld [vmem:[%s275 + $0x7e8] sm:$0xff]
        %v789 = vld [vmem:[%s275 + $0x7f0] sm:$0xff]
        %v790 = vld [vmem:[%s275 + $0x7f8] sm:$0xff]
        %s791 = sld [smem:[#allocation2]]
        %v792 = vstv %s791
        %vm793 = vcmask 523264
        %v795 = vsel %vm793, %v278, 0
        %v798 = vsel %vm793, %v279, 0
        %v801 = vsel %vm793, %v280, 0
        %v804 = vsel %vm793, %v281, 0
        %v807 = vsel %vm793, %v282, 0
        %v810 = vsel %vm793, %v283, 0
        %v813 = vsel %vm793, %v284, 0
        %v816 = vsel %vm793, %v285, 0
        %v819 = vsel %vm793, %v286, 0
        %v822 = vsel %vm793, %v287, 0
        %v825 = vsel %vm793, %v288, 0
        %v828 = vsel %vm793, %v289, 0
        %v831 = vsel %vm793, %v290, 0
        %v834 = vsel %vm793, %v291, 0
        %v837 = vsel %vm793, %v292, 0
        %v840 = vsel %vm793, %v293, 0
        %v843 = vsel %vm793, %v294, 0
        %v846 = vsel %vm793, %v295, 0
        %v849 = vsel %vm793, %v296, 0
        %v852 = vsel %vm793, %v297, 0
        %v855 = vsel %vm793, %v298, 0
        %v858 = vsel %vm793, %v299, 0
        %v861 = vsel %vm793, %v300, 0
        %v864 = vsel %vm793, %v301, 0
        %v867 = vsel %vm793, %v302, 0
        %v870 = vsel %vm793, %v303, 0
        %v873 = vsel %vm793, %v304, 0
        %v876 = vsel %vm793, %v305, 0
        %v879 = vsel %vm793, %v306, 0
        %v882 = vsel %vm793, %v307, 0
        %v885 = vsel %vm793, %v308, 0
        %v888 = vsel %vm793, %v309, 0
        %v891 = vsel %vm793, %v310, 0
        %v894 = vsel %vm793, %v311, 0
        %v897 = vsel %vm793, %v312, 0
        %v900 = vsel %vm793, %v313, 0
        %v903 = vsel %vm793, %v314, 0
        %v906 = vsel %vm793, %v315, 0
        %v909 = vsel %vm793, %v316, 0
        %v912 = vsel %vm793, %v317, 0
        %v915 = vsel %vm793, %v318, 0
        %v918 = vsel %vm793, %v319, 0
        %v921 = vsel %vm793, %v320, 0
        %v924 = vsel %vm793, %v321, 0
        %v927 = vsel %vm793, %v322, 0
        %v930 = vsel %vm793, %v323, 0
        %v933 = vsel %vm793, %v324, 0
        %v936 = vsel %vm793, %v325, 0
        %v939 = vsel %vm793, %v326, 0
        %v942 = vsel %vm793, %v327, 0
        %v945 = vsel %vm793, %v328, 0
        %v948 = vsel %vm793, %v329, 0
        %v951 = vsel %vm793, %v330, 0
        %v954 = vsel %vm793, %v331, 0
        %v957 = vsel %vm793, %v332, 0
        %v960 = vsel %vm793, %v333, 0
        %v963 = vsel %vm793, %v334, 0
        %v966 = vsel %vm793, %v335, 0
        %v969 = vsel %vm793, %v336, 0
        %v972 = vsel %vm793, %v337, 0
        %v975 = vsel %vm793, %v338, 0
        %v978 = vsel %vm793, %v339, 0
        %v981 = vsel %vm793, %v340, 0
        %v984 = vsel %vm793, %v341, 0
        %v987 = vsel %vm793, %v342, 0
        %v990 = vsel %vm793, %v343, 0
        %v993 = vsel %vm793, %v344, 0
        %v996 = vsel %vm793, %v345, 0
        %v999 = vsel %vm793, %v346, 0
        %v1002 = vsel %vm793, %v347, 0
        %v1005 = vsel %vm793, %v348, 0
        %v1008 = vsel %vm793, %v349, 0
        %v1011 = vsel %vm793, %v350, 0
        %v1014 = vsel %vm793, %v351, 0
        %v1017 = vsel %vm793, %v352, 0
        %v1020 = vsel %vm793, %v353, 0
        %v1023 = vsel %vm793, %v354, 0
        %v1026 = vsel %vm793, %v355, 0
        %v1029 = vsel %vm793, %v356, 0
        %v1032 = vsel %vm793, %v357, 0
        %v1035 = vsel %vm793, %v358, 0
        %v1038 = vsel %vm793, %v359, 0
        %v1041 = vsel %vm793, %v360, 0
        %v1044 = vsel %vm793, %v361, 0
        %v1047 = vsel %vm793, %v362, 0
        %v1050 = vsel %vm793, %v363, 0
        %v1053 = vsel %vm793, %v364, 0
        %v1056 = vsel %vm793, %v365, 0
        %v1059 = vsel %vm793, %v366, 0
        %v1062 = vsel %vm793, %v367, 0
        %v1065 = vsel %vm793, %v368, 0
        %v1068 = vsel %vm793, %v369, 0
        %v1071 = vsel %vm793, %v370, 0
        %v1074 = vsel %vm793, %v371, 0
        %v1077 = vsel %vm793, %v372, 0
        %v1080 = vsel %vm793, %v373, 0
        %v1083 = vsel %vm793, %v374, 0
        %v1086 = vsel %vm793, %v375, 0
        %v1089 = vsel %vm793, %v376, 0
        %v1092 = vsel %vm793, %v377, 0
        %v1095 = vsel %vm793, %v378, 0
        %v1098 = vsel %vm793, %v379, 0
        %v1101 = vsel %vm793, %v380, 0
        %v1104 = vsel %vm793, %v381, 0
        %v1107 = vsel %vm793, %v382, 0
        %v1110 = vsel %vm793, %v383, 0
        %v1113 = vsel %vm793, %v384, 0
        %v1116 = vsel %vm793, %v385, 0
        %v1119 = vsel %vm793, %v386, 0
        %v1122 = vsel %vm793, %v387, 0
        %v1125 = vsel %vm793, %v388, 0
        %v1128 = vsel %vm793, %v389, 0
        %v1131 = vsel %vm793, %v390, 0
        %v1134 = vsel %vm793, %v391, 0
        %v1137 = vsel %vm793, %v392, 0
        %v1140 = vsel %vm793, %v393, 0
        %v1143 = vsel %vm793, %v394, 0
        %v1146 = vsel %vm793, %v395, 0
        %v1149 = vsel %vm793, %v396, 0
        %v1152 = vsel %vm793, %v397, 0
        %v1155 = vsel %vm793, %v398, 0
        %v1158 = vsel %vm793, %v399, 0
        %v1161 = vsel %vm793, %v400, 0
        %v1164 = vsel %vm793, %v401, 0
        %v1167 = vsel %vm793, %v402, 0
        %v1170 = vsel %vm793, %v403, 0
        %v1173 = vsel %vm793, %v404, 0
        %v1176 = vsel %vm793, %v405, 0
        %v1179 = vsel %vm793, %v406, 0
        %v1182 = vsel %vm793, %v407, 0
        %v1185 = vsel %vm793, %v408, 0
        %v1188 = vsel %vm793, %v409, 0
        %v1191 = vsel %vm793, %v410, 0
        %v1194 = vsel %vm793, %v411, 0
        %v1197 = vsel %vm793, %v412, 0
        %v1200 = vsel %vm793, %v413, 0
        %v1203 = vsel %vm793, %v414, 0
        %v1206 = vsel %vm793, %v415, 0
        %v1209 = vsel %vm793, %v416, 0
        %v1212 = vsel %vm793, %v417, 0
        %v1215 = vsel %vm793, %v418, 0
        %v1218 = vsel %vm793, %v419, 0
        %v1221 = vsel %vm793, %v420, 0
        %v1224 = vsel %vm793, %v421, 0
        %v1227 = vsel %vm793, %v422, 0
        %v1230 = vsel %vm793, %v423, 0
        %v1233 = vsel %vm793, %v424, 0
        %v1236 = vsel %vm793, %v425, 0
        %v1239 = vsel %vm793, %v426, 0
        %v1242 = vsel %vm793, %v427, 0
        %v1245 = vsel %vm793, %v428, 0
        %v1248 = vsel %vm793, %v429, 0
        %v1251 = vsel %vm793, %v430, 0
        %v1254 = vsel %vm793, %v431, 0
        %v1257 = vsel %vm793, %v432, 0
        %v1260 = vsel %vm793, %v433, 0
        %v1263 = vsel %vm793, %v434, 0
        %v1266 = vsel %vm793, %v435, 0
        %v1269 = vsel %vm793, %v436, 0
        %v1272 = vsel %vm793, %v437, 0
        %v1275 = vsel %vm793, %v438, 0
        %v1278 = vsel %vm793, %v439, 0
        %v1281 = vsel %vm793, %v440, 0
        %v1284 = vsel %vm793, %v441, 0
        %v1287 = vsel %vm793, %v442, 0
        %v1290 = vsel %vm793, %v443, 0
        %v1293 = vsel %vm793, %v444, 0
        %v1296 = vsel %vm793, %v445, 0
        %v1299 = vsel %vm793, %v446, 0
        %v1302 = vsel %vm793, %v447, 0
        %v1305 = vsel %vm793, %v448, 0
        %v1308 = vsel %vm793, %v449, 0
        %v1311 = vsel %vm793, %v450, 0
        %v1314 = vsel %vm793, %v451, 0
        %v1317 = vsel %vm793, %v452, 0
        %v1320 = vsel %vm793, %v453, 0
        %v1323 = vsel %vm793, %v454, 0
        %v1326 = vsel %vm793, %v455, 0
        %v1329 = vsel %vm793, %v456, 0
        %v1332 = vsel %vm793, %v457, 0
        %v1335 = vsel %vm793, %v458, 0
        %v1338 = vsel %vm793, %v459, 0
        %v1341 = vsel %vm793, %v460, 0
        %v1344 = vsel %vm793, %v461, 0
        %v1347 = vsel %vm793, %v462, 0
        %v1350 = vsel %vm793, %v463, 0
        %v1353 = vsel %vm793, %v464, 0
        %v1356 = vsel %vm793, %v465, 0
        %v1359 = vsel %vm793, %v466, 0
        %v1362 = vsel %vm793, %v467, 0
        %v1365 = vsel %vm793, %v468, 0
        %v1368 = vsel %vm793, %v469, 0
        %v1371 = vsel %vm793, %v470, 0
        %v1374 = vsel %vm793, %v471, 0
        %v1377 = vsel %vm793, %v472, 0
        %v1380 = vsel %vm793, %v473, 0
        %v1383 = vsel %vm793, %v474, 0
        %v1386 = vsel %vm793, %v475, 0
        %v1389 = vsel %vm793, %v476, 0
        %v1392 = vsel %vm793, %v477, 0
        %v1395 = vsel %vm793, %v478, 0
        %v1398 = vsel %vm793, %v479, 0
        %v1401 = vsel %vm793, %v480, 0
        %v1404 = vsel %vm793, %v481, 0
        %v1407 = vsel %vm793, %v482, 0
        %v1410 = vsel %vm793, %v483, 0
        %v1413 = vsel %vm793, %v484, 0
        %v1416 = vsel %vm793, %v485, 0
        %v1419 = vsel %vm793, %v486, 0
        %v1422 = vsel %vm793, %v487, 0
        %v1425 = vsel %vm793, %v488, 0
        %v1428 = vsel %vm793, %v489, 0
        %v1431 = vsel %vm793, %v490, 0
        %v1434 = vsel %vm793, %v491, 0
        %v1437 = vsel %vm793, %v492, 0
        %v1440 = vsel %vm793, %v493, 0
        %v1443 = vsel %vm793, %v494, 0
        %v1446 = vsel %vm793, %v495, 0
        %v1449 = vsel %vm793, %v496, 0
        %v1452 = vsel %vm793, %v497, 0
        %v1455 = vsel %vm793, %v498, 0
        %v1458 = vsel %vm793, %v499, 0
        %v1461 = vsel %vm793, %v500, 0
        %v1464 = vsel %vm793, %v501, 0
        %v1467 = vsel %vm793, %v502, 0
        %v1470 = vsel %vm793, %v503, 0
        %v1473 = vsel %vm793, %v504, 0
        %v1476 = vsel %vm793, %v505, 0
        %v1479 = vsel %vm793, %v506, 0
        %v1482 = vsel %vm793, %v507, 0
        %v1485 = vsel %vm793, %v508, 0
        %v1488 = vsel %vm793, %v509, 0
        %v1491 = vsel %vm793, %v510, 0
        %v1494 = vsel %vm793, %v511, 0
        %v1497 = vsel %vm793, %v512, 0
        %v1500 = vsel %vm793, %v513, 0
        %v1503 = vsel %vm793, %v514, 0
        %v1506 = vsel %vm793, %v515, 0
        %v1509 = vsel %vm793, %v516, 0
        %v1512 = vsel %vm793, %v517, 0
        %v1515 = vsel %vm793, %v518, 0
        %v1518 = vsel %vm793, %v519, 0
        %v1521 = vsel %vm793, %v520, 0
        %v1524 = vsel %vm793, %v521, 0
        %v1527 = vsel %vm793, %v522, 0
        %v1530 = vsel %vm793, %v523, 0
        %v1533 = vsel %vm793, %v524, 0
        %v1536 = vsel %vm793, %v525, 0
        %v1539 = vsel %vm793, %v526, 0
        %v1542 = vsel %vm793, %v527, 0
        %v1545 = vsel %vm793, %v528, 0
        %v1548 = vsel %vm793, %v529, 0
        %v1551 = vsel %vm793, %v530, 0
        %v1554 = vsel %vm793, %v531, 0
        %v1557 = vsel %vm793, %v532, 0
        %v1560 = vsel %vm793, %v533, 0
        %v1563 = vsel %vm793, %v534, 0
        %1565 = vmatprep.subr.mxu0 0.0
        %1566 = vmatpush1.xpose.msra.mxu0 %v843
        %1567 = vmatprep.subr.mxu0 0.0
        %1568 = vmatpush1.xpose.msra.mxu0 %v840
        %1569 = vmatprep.subr.mxu0 0.0
        %1570 = vmatpush1.xpose.msra.mxu0 %v837
        %1571 = vmatprep.subr.mxu0 0.0
        %1572 = vmatpush1.xpose.msra.mxu0 %v834
        %1573 = vmatprep.subr.mxu0 0.0
        %1574 = vmatpush1.xpose.msra.mxu0 %v831
        %1575 = vmatprep.subr.mxu0 0.0
        %1576 = vmatpush1.xpose.msra.mxu0 %v828
        %1577 = vmatprep.subr.mxu0 0.0
        %1578 = vmatpush1.xpose.msra.mxu0 %v825
        %1579 = vmatprep.subr.mxu0 0.0
        %1580 = vmatpush1.xpose.msra.mxu0 %v822
        %1581 = vmatprep.subr.mxu0 0.0
        %1582 = vmatpush1.xpose.msra.mxu0 %v819
        %1583 = vmatprep.subr.mxu0 0.0
        %1584 = vmatpush1.xpose.msra.mxu0 %v816
        %1585 = vmatprep.subr.mxu0 0.0
        %1586 = vmatpush1.xpose.msra.mxu0 %v813
        %1587 = vmatprep.subr.mxu0 0.0
        %1588 = vmatpush1.xpose.msra.mxu0 %v810
        %1589 = vmatprep.subr.mxu0 0.0
        %1590 = vmatpush1.xpose.msra.mxu0 %v807
        %1591 = vmatprep.subr.mxu0 0.0
        %1592 = vmatpush1.xpose.msra.mxu0 %v804
        %1593 = vmatprep.subr.mxu0 0.0
        %1594 = vmatpush1.xpose.msra.mxu0 %v801
        %1595 = vmatprep.subr.mxu0 0.0
        %1596 = vmatpush1.xpose.msra.mxu0 %v798
        %1597 = vmatprep.subr.mxu0 0.0
        %1598 = vmatpush2.xpose.msra.mxu0 %v891
        %1599 = vmatprep.subr.mxu0 0.0
        %1600 = vmatpush2.xpose.msra.mxu0 %v888
        %1601 = vmatprep.subr.mxu0 0.0
        %1602 = vmatpush2.xpose.msra.mxu0 %v885
        %1603 = vmatprep.subr.mxu0 0.0
        %1604 = vmatpush2.xpose.msra.mxu0 %v882
        %1605 = vmatprep.subr.mxu0 0.0
        %1606 = vmatpush2.xpose.msra.mxu0 %v879
        %1607 = vmatprep.subr.mxu0 0.0
        %1608 = vmatpush2.xpose.msra.mxu0 %v876
        %1609 = vmatprep.subr.mxu0 0.0
        %1610 = vmatpush2.xpose.msra.mxu0 %v873
        %1611 = vmatprep.subr.mxu0 0.0
        %1612 = vmatpush2.xpose.msra.mxu0 %v870
        %1613 = vmatprep.subr.mxu0 0.0
        %1614 = vmatpush2.xpose.msra.mxu0 %v867
        %1615 = vmatprep.subr.mxu0 0.0
        %1616 = vmatpush2.xpose.msra.mxu0 %v864
        %1617 = vmatprep.subr.mxu0 0.0
        %1618 = vmatpush2.xpose.msra.mxu0 %v861
        %1619 = vmatprep.subr.mxu0 0.0
        %1620 = vmatpush2.xpose.msra.mxu0 %v858
        %1621 = vmatprep.subr.mxu0 0.0
        %1622 = vmatpush2.xpose.msra.mxu0 %v855
        %1623 = vmatprep.subr.mxu0 0.0
        %1624 = vmatpush2.xpose.msra.mxu0 %v852
        %1625 = vmatprep.subr.mxu0 0.0
        %1626 = vmatpush2.xpose.msra.mxu0 %v849
        %1627 = vmatprep.subr.mxu0 0.0
        %1628 = vmatpush2.xpose.msra.mxu0 %v846
        %1629 = vmatprep.mubr.f32.mxu0 0.0
        %1630 = vmatmul.mubr.f32.gmra.mxu0 %v795
        %v1631 = vpop.f32.mrf.mxu0
        %v1632 = vadd.f32 %v792, %v1631
        %v1633 = vpop.f32.mrf.mxu0
        %v1634 = vadd.f32 %v792, %v1633
        %1635 = vdwg.mxu0
        %1636 = vmatprep.subr.mxu0 0.0
        %1637 = vmatpush1.xpose.msra.mxu0 %v939
        %1638 = vmatprep.subr.mxu0 0.0
        %1639 = vmatpush1.xpose.msra.mxu0 %v936
        %1640 = vmatprep.subr.mxu0 0.0
        %1641 = vmatpush1.xpose.msra.mxu0 %v933
        %1642 = vmatprep.subr.mxu0 0.0
        %1643 = vmatpush1.xpose.msra.mxu0 %v930
        %1644 = vmatprep.subr.mxu0 0.0
        %1645 = vmatpush1.xpose.msra.mxu0 %v927
        %1646 = vmatprep.subr.mxu0 0.0
        %1647 = vmatpush1.xpose.msra.mxu0 %v924
        %1648 = vmatprep.subr.mxu0 0.0
        %1649 = vmatpush1.xpose.msra.mxu0 %v921
        %1650 = vmatprep.subr.mxu0 0.0
        %1651 = vmatpush1.xpose.msra.mxu0 %v918
        %1652 = vmatprep.subr.mxu0 0.0
        %1653 = vmatpush1.xpose.msra.mxu0 %v915
        %1654 = vmatprep.subr.mxu0 0.0
        %1655 = vmatpush1.xpose.msra.mxu0 %v912
        %1656 = vmatprep.subr.mxu0 0.0
        %1657 = vmatpush1.xpose.msra.mxu0 %v909
        %1658 = vmatprep.subr.mxu0 0.0
        %1659 = vmatpush1.xpose.msra.mxu0 %v906
        %1660 = vmatprep.subr.mxu0 0.0
        %1661 = vmatpush1.xpose.msra.mxu0 %v903
        %1662 = vmatprep.subr.mxu0 0.0
        %1663 = vmatpush1.xpose.msra.mxu0 %v900
        %1664 = vmatprep.subr.mxu0 0.0
        %1665 = vmatpush1.xpose.msra.mxu0 %v897
        %1666 = vmatprep.subr.mxu0 0.0
        %1667 = vmatpush1.xpose.msra.mxu0 %v894
        %1668 = vmatprep.subr.mxu0 0.0
        %1669 = vmatpush2.xpose.msra.mxu0 %v987
        %1670 = vmatprep.subr.mxu0 0.0
        %1671 = vmatpush2.xpose.msra.mxu0 %v984
        %1672 = vmatprep.subr.mxu0 0.0
        %1673 = vmatpush2.xpose.msra.mxu0 %v981
        %1674 = vmatprep.subr.mxu0 0.0
        %1675 = vmatpush2.xpose.msra.mxu0 %v978
        %1676 = vmatprep.subr.mxu0 0.0
        %1677 = vmatpush2.xpose.msra.mxu0 %v975
        %1678 = vmatprep.subr.mxu0 0.0
        %1679 = vmatpush2.xpose.msra.mxu0 %v972
        %1680 = vmatprep.subr.mxu0 0.0
        %1681 = vmatpush2.xpose.msra.mxu0 %v969
        %1682 = vmatprep.subr.mxu0 0.0
        %1683 = vmatpush2.xpose.msra.mxu0 %v966
        %1684 = vmatprep.subr.mxu0 0.0
        %1685 = vmatpush2.xpose.msra.mxu0 %v963
        %1686 = vmatprep.subr.mxu0 0.0
        %1687 = vmatpush2.xpose.msra.mxu0 %v960
        %1688 = vmatprep.subr.mxu0 0.0
        %1689 = vmatpush2.xpose.msra.mxu0 %v957
        %1690 = vmatprep.subr.mxu0 0.0
        %1691 = vmatpush2.xpose.msra.mxu0 %v954
        %1692 = vmatprep.subr.mxu0 0.0
        %1693 = vmatpush2.xpose.msra.mxu0 %v951
        %1694 = vmatprep.subr.mxu0 0.0
        %1695 = vmatpush2.xpose.msra.mxu0 %v948
        %1696 = vmatprep.subr.mxu0 0.0
        %1697 = vmatpush2.xpose.msra.mxu0 %v945
        %1698 = vmatprep.subr.mxu0 0.0
        %1699 = vmatpush2.xpose.msra.mxu0 %v942
        %1700 = vmatprep.mubr.f32.mxu0 0.0
        %1701 = vmatmul.mubr.f32.gmra.mxu0 %v795
        %v1702 = vpop.f32.mrf.mxu0
        %v1703 = vadd.f32 %v792, %v1702
        %v1704 = vpop.f32.mrf.mxu0
        %v1705 = vadd.f32 %v792, %v1704
        %1706 = vdwg.mxu0
        %1707 = vmatprep.subr.mxu0 0.0
        %1708 = vmatpush1.xpose.msra.mxu0 %v1035
        %1709 = vmatprep.subr.mxu0 0.0
        %1710 = vmatpush1.xpose.msra.mxu0 %v1032
        %1711 = vmatprep.subr.mxu0 0.0
        %1712 = vmatpush1.xpose.msra.mxu0 %v1029
        %1713 = vmatprep.subr.mxu0 0.0
        %1714 = vmatpush1.xpose.msra.mxu0 %v1026
        %1715 = vmatprep.subr.mxu0 0.0
        %1716 = vmatpush1.xpose.msra.mxu0 %v1023
        %1717 = vmatprep.subr.mxu0 0.0
        %1718 = vmatpush1.xpose.msra.mxu0 %v1020
        %1719 = vmatprep.subr.mxu0 0.0
        %1720 = vmatpush1.xpose.msra.mxu0 %v1017
        %1721 = vmatprep.subr.mxu0 0.0
        %1722 = vmatpush1.xpose.msra.mxu0 %v1014
        %1723 = vmatprep.subr.mxu0 0.0
        %1724 = vmatpush1.xpose.msra.mxu0 %v1011
        %1725 = vmatprep.subr.mxu0 0.0
        %1726 = vmatpush1.xpose.msra.mxu0 %v1008
        %1727 = vmatprep.subr.mxu0 0.0
        %1728 = vmatpush1.xpose.msra.mxu0 %v1005
        %1729 = vmatprep.subr.mxu0 0.0
        %1730 = vmatpush1.xpose.msra.mxu0 %v1002
        %1731 = vmatprep.subr.mxu0 0.0
        %1732 = vmatpush1.xpose.msra.mxu0 %v999
        %1733 = vmatprep.subr.mxu0 0.0
        %1734 = vmatpush1.xpose.msra.mxu0 %v996
        %1735 = vmatprep.subr.mxu0 0.0
        %1736 = vmatpush1.xpose.msra.mxu0 %v993
        %1737 = vmatprep.subr.mxu0 0.0
        %1738 = vmatpush1.xpose.msra.mxu0 %v990
        %1739 = vmatprep.subr.mxu0 0.0
        %1740 = vmatpush2.xpose.msra.mxu0 %v1083
        %1741 = vmatprep.subr.mxu0 0.0
        %1742 = vmatpush2.xpose.msra.mxu0 %v1080
        %1743 = vmatprep.subr.mxu0 0.0
        %1744 = vmatpush2.xpose.msra.mxu0 %v1077
        %1745 = vmatprep.subr.mxu0 0.0
        %1746 = vmatpush2.xpose.msra.mxu0 %v1074
        %1747 = vmatprep.subr.mxu0 0.0
        %1748 = vmatpush2.xpose.msra.mxu0 %v1071
        %1749 = vmatprep.subr.mxu0 0.0
        %1750 = vmatpush2.xpose.msra.mxu0 %v1068
        %1751 = vmatprep.subr.mxu0 0.0
        %1752 = vmatpush2.xpose.msra.mxu0 %v1065
        %1753 = vmatprep.subr.mxu0 0.0
        %1754 = vmatpush2.xpose.msra.mxu0 %v1062
        %1755 = vmatprep.subr.mxu0 0.0
        %1756 = vmatpush2.xpose.msra.mxu0 %v1059
        %1757 = vmatprep.subr.mxu0 0.0
        %1758 = vmatpush2.xpose.msra.mxu0 %v1056
        %1759 = vmatprep.subr.mxu0 0.0
        %1760 = vmatpush2.xpose.msra.mxu0 %v1053
        %1761 = vmatprep.subr.mxu0 0.0
        %1762 = vmatpush2.xpose.msra.mxu0 %v1050
        %1763 = vmatprep.subr.mxu0 0.0
        %1764 = vmatpush2.xpose.msra.mxu0 %v1047
        %1765 = vmatprep.subr.mxu0 0.0
        %1766 = vmatpush2.xpose.msra.mxu0 %v1044
        %1767 = vmatprep.subr.mxu0 0.0
        %1768 = vmatpush2.xpose.msra.mxu0 %v1041
        %1769 = vmatprep.subr.mxu0 0.0
        %1770 = vmatpush2.xpose.msra.mxu0 %v1038
        %1771 = vmatprep.mubr.f32.mxu0 0.0
        %1772 = vmatmul.mubr.f32.gmra.mxu0 %v795
        %v1773 = vpop.f32.mrf.mxu0
        %v1774 = vadd.f32 %v792, %v1773
        %v1775 = vpop.f32.mrf.mxu0
        %v1776 = vadd.f32 %v792, %v1775
        %1777 = vdwg.mxu0
        %1778 = vmatprep.subr.mxu0 0.0
        %1779 = vmatpush1.xpose.msra.mxu0 %v1131
        %1780 = vmatprep.subr.mxu0 0.0
        %1781 = vmatpush1.xpose.msra.mxu0 %v1128
        %1782 = vmatprep.subr.mxu0 0.0
        %1783 = vmatpush1.xpose.msra.mxu0 %v1125
        %1784 = vmatprep.subr.mxu0 0.0
        %1785 = vmatpush1.xpose.msra.mxu0 %v1122
        %1786 = vmatprep.subr.mxu0 0.0
        %1787 = vmatpush1.xpose.msra.mxu0 %v1119
        %1788 = vmatprep.subr.mxu0 0.0
        %1789 = vmatpush1.xpose.msra.mxu0 %v1116
        %1790 = vmatprep.subr.mxu0 0.0
        %1791 = vmatpush1.xpose.msra.mxu0 %v1113
        %1792 = vmatprep.subr.mxu0 0.0
        %1793 = vmatpush1.xpose.msra.mxu0 %v1110
        %1794 = vmatprep.subr.mxu0 0.0
        %1795 = vmatpush1.xpose.msra.mxu0 %v1107
        %1796 = vmatprep.subr.mxu0 0.0
        %1797 = vmatpush1.xpose.msra.mxu0 %v1104
        %1798 = vmatprep.subr.mxu0 0.0
        %1799 = vmatpush1.xpose.msra.mxu0 %v1101
        %1800 = vmatprep.subr.mxu0 0.0
        %1801 = vmatpush1.xpose.msra.mxu0 %v1098
        %1802 = vmatprep.subr.mxu0 0.0
        %1803 = vmatpush1.xpose.msra.mxu0 %v1095
        %1804 = vmatprep.subr.mxu0 0.0
        %1805 = vmatpush1.xpose.msra.mxu0 %v1092
        %1806 = vmatprep.subr.mxu0 0.0
        %1807 = vmatpush1.xpose.msra.mxu0 %v1089
        %1808 = vmatprep.subr.mxu0 0.0
        %1809 = vmatpush1.xpose.msra.mxu0 %v1086
        %1810 = vmatprep.subr.mxu0 0.0
        %1811 = vmatpush2.xpose.msra.mxu0 %v1179
        %1812 = vmatprep.subr.mxu0 0.0
        %1813 = vmatpush2.xpose.msra.mxu0 %v1176
        %1814 = vmatprep.subr.mxu0 0.0
        %1815 = vmatpush2.xpose.msra.mxu0 %v1173
        %1816 = vmatprep.subr.mxu0 0.0
        %1817 = vmatpush2.xpose.msra.mxu0 %v1170
        %1818 = vmatprep.subr.mxu0 0.0
        %1819 = vmatpush2.xpose.msra.mxu0 %v1167
        %1820 = vmatprep.subr.mxu0 0.0
        %1821 = vmatpush2.xpose.msra.mxu0 %v1164
        %1822 = vmatprep.subr.mxu0 0.0
        %1823 = vmatpush2.xpose.msra.mxu0 %v1161
        %1824 = vmatprep.subr.mxu0 0.0
        %1825 = vmatpush2.xpose.msra.mxu0 %v1158
        %1826 = vmatprep.subr.mxu0 0.0
        %1827 = vmatpush2.xpose.msra.mxu0 %v1155
        %1828 = vmatprep.subr.mxu0 0.0
        %1829 = vmatpush2.xpose.msra.mxu0 %v1152
        %1830 = vmatprep.subr.mxu0 0.0
        %1831 = vmatpush2.xpose.msra.mxu0 %v1149
        %1832 = vmatprep.subr.mxu0 0.0
        %1833 = vmatpush2.xpose.msra.mxu0 %v1146
        %1834 = vmatprep.subr.mxu0 0.0
        %1835 = vmatpush2.xpose.msra.mxu0 %v1143
        %1836 = vmatprep.subr.mxu0 0.0
        %1837 = vmatpush2.xpose.msra.mxu0 %v1140
        %1838 = vmatprep.subr.mxu0 0.0
        %1839 = vmatpush2.xpose.msra.mxu0 %v1137
        %1840 = vmatprep.subr.mxu0 0.0
        %1841 = vmatpush2.xpose.msra.mxu0 %v1134
        %1842 = vmatprep.mubr.f32.mxu0 0.0
        %1843 = vmatmul.mubr.f32.gmra.mxu0 %v795
        %v1844 = vpop.f32.mrf.mxu0
        %v1845 = vadd.f32 %v792, %v1844
        %v1846 = vpop.f32.mrf.mxu0
        %v1847 = vadd.f32 %v792, %v1846
        %1848 = vdwg.mxu0
        %1849 = vmatprep.subr.mxu0 0.0
        %1850 = vmatpush1.xpose.msra.mxu0 %v1227
        %1851 = vmatprep.subr.mxu0 0.0
        %1852 = vmatpush1.xpose.msra.mxu0 %v1224
        %1853 = vmatprep.subr.mxu0 0.0
        %1854 = vmatpush1.xpose.msra.mxu0 %v1221
        %1855 = vmatprep.subr.mxu0 0.0
        %1856 = vmatpush1.xpose.msra.mxu0 %v1218
        %1857 = vmatprep.subr.mxu0 0.0
        %1858 = vmatpush1.xpose.msra.mxu0 %v1215
        %1859 = vmatprep.subr.mxu0 0.0
        %1860 = vmatpush1.xpose.msra.mxu0 %v1212
        %1861 = vmatprep.subr.mxu0 0.0
        %1862 = vmatpush1.xpose.msra.mxu0 %v1209
        %1863 = vmatprep.subr.mxu0 0.0
        %1864 = vmatpush1.xpose.msra.mxu0 %v1206
        %1865 = vmatprep.subr.mxu0 0.0
        %1866 = vmatpush1.xpose.msra.mxu0 %v1203
        %1867 = vmatprep.subr.mxu0 0.0
        %1868 = vmatpush1.xpose.msra.mxu0 %v1200
        %1869 = vmatprep.subr.mxu0 0.0
        %1870 = vmatpush1.xpose.msra.mxu0 %v1197
        %1871 = vmatprep.subr.mxu0 0.0
        %1872 = vmatpush1.xpose.msra.mxu0 %v1194
        %1873 = vmatprep.subr.mxu0 0.0
        %1874 = vmatpush1.xpose.msra.mxu0 %v1191
        %1875 = vmatprep.subr.mxu0 0.0
        %1876 = vmatpush1.xpose.msra.mxu0 %v1188
        %1877 = vmatprep.subr.mxu0 0.0
        %1878 = vmatpush1.xpose.msra.mxu0 %v1185
        %1879 = vmatprep.subr.mxu0 0.0
        %1880 = vmatpush1.xpose.msra.mxu0 %v1182
        %1881 = vmatprep.subr.mxu0 0.0
        %1882 = vmatpush2.xpose.msra.mxu0 %v1275
        %1883 = vmatprep.subr.mxu0 0.0
        %1884 = vmatpush2.xpose.msra.mxu0 %v1272
        %1885 = vmatprep.subr.mxu0 0.0
        %1886 = vmatpush2.xpose.msra.mxu0 %v1269
        %1887 = vmatprep.subr.mxu0 0.0
        %1888 = vmatpush2.xpose.msra.mxu0 %v1266
        %1889 = vmatprep.subr.mxu0 0.0
        %1890 = vmatpush2.xpose.msra.mxu0 %v1263
        %1891 = vmatprep.subr.mxu0 0.0
        %1892 = vmatpush2.xpose.msra.mxu0 %v1260
        %1893 = vmatprep.subr.mxu0 0.0
        %1894 = vmatpush2.xpose.msra.mxu0 %v1257
        %1895 = vmatprep.subr.mxu0 0.0
        %1896 = vmatpush2.xpose.msra.mxu0 %v1254
        %1897 = vmatprep.subr.mxu0 0.0
        %1898 = vmatpush2.xpose.msra.mxu0 %v1251
        %1899 = vmatprep.subr.mxu0 0.0
        %1900 = vmatpush2.xpose.msra.mxu0 %v1248
        %1901 = vmatprep.subr.mxu0 0.0
        %1902 = vmatpush2.xpose.msra.mxu0 %v1245
        %1903 = vmatprep.subr.mxu0 0.0
        %1904 = vmatpush2.xpose.msra.mxu0 %v1242
        %1905 = vmatprep.subr.mxu0 0.0
        %1906 = vmatpush2.xpose.msra.mxu0 %v1239
        %1907 = vmatprep.subr.mxu0 0.0
        %1908 = vmatpush2.xpose.msra.mxu0 %v1236
        %1909 = vmatprep.subr.mxu0 0.0
        %1910 = vmatpush2.xpose.msra.mxu0 %v1233
        %1911 = vmatprep.subr.mxu0 0.0
        %1912 = vmatpush2.xpose.msra.mxu0 %v1230
        %1913 = vmatprep.mubr.f32.mxu0 0.0
        %1914 = vmatmul.mubr.f32.gmra.mxu0 %v795
        %v1915 = vpop.f32.mrf.mxu0
        %v1916 = vadd.f32 %v792, %v1915
        %v1917 = vpop.f32.mrf.mxu0
        %v1918 = vadd.f32 %v792, %v1917
        %1919 = vdwg.mxu0
        %1920 = vmatprep.subr.mxu0 0.0
        %1921 = vmatpush1.xpose.msra.mxu0 %v1323
        %1922 = vmatprep.subr.mxu0 0.0
        %1923 = vmatpush1.xpose.msra.mxu0 %v1320
        %1924 = vmatprep.subr.mxu0 0.0
        %1925 = vmatpush1.xpose.msra.mxu0 %v1317
        %1926 = vmatprep.subr.mxu0 0.0
        %1927 = vmatpush1.xpose.msra.mxu0 %v1314
        %1928 = vmatprep.subr.mxu0 0.0
        %1929 = vmatpush1.xpose.msra.mxu0 %v1311
        %1930 = vmatprep.subr.mxu0 0.0
        %1931 = vmatpush1.xpose.msra.mxu0 %v1308
        %1932 = vmatprep.subr.mxu0 0.0
        %1933 = vmatpush1.xpose.msra.mxu0 %v1305
        %1934 = vmatprep.subr.mxu0 0.0
        %1935 = vmatpush1.xpose.msra.mxu0 %v1302
        %1936 = vmatprep.subr.mxu0 0.0
        %1937 = vmatpush1.xpose.msra.mxu0 %v1299
        %1938 = vmatprep.subr.mxu0 0.0
        %1939 = vmatpush1.xpose.msra.mxu0 %v1296
        %1940 = vmatprep.subr.mxu0 0.0
        %1941 = vmatpush1.xpose.msra.mxu0 %v1293
        %1942 = vmatprep.subr.mxu0 0.0
        %1943 = vmatpush1.xpose.msra.mxu0 %v1290
        %1944 = vmatprep.subr.mxu0 0.0
        %1945 = vmatpush1.xpose.msra.mxu0 %v1287
        %1946 = vmatprep.subr.mxu0 0.0
        %1947 = vmatpush1.xpose.msra.mxu0 %v1284
        %1948 = vmatprep.subr.mxu0 0.0
        %1949 = vmatpush1.xpose.msra.mxu0 %v1281
        %1950 = vmatprep.subr.mxu0 0.0
        %1951 = vmatpush1.xpose.msra.mxu0 %v1278
        %1952 = vmatprep.subr.mxu0 0.0
        %1953 = vmatpush2.xpose.msra.mxu0 %v1371
        %1954 = vmatprep.subr.mxu0 0.0
        %1955 = vmatpush2.xpose.msra.mxu0 %v1368
        %1956 = vmatprep.subr.mxu0 0.0
        %1957 = vmatpush2.xpose.msra.mxu0 %v1365
        %1958 = vmatprep.subr.mxu0 0.0
        %1959 = vmatpush2.xpose.msra.mxu0 %v1362
        %1960 = vmatprep.subr.mxu0 0.0
        %1961 = vmatpush2.xpose.msra.mxu0 %v1359
        %1962 = vmatprep.subr.mxu0 0.0
        %1963 = vmatpush2.xpose.msra.mxu0 %v1356
        %1964 = vmatprep.subr.mxu0 0.0
        %1965 = vmatpush2.xpose.msra.mxu0 %v1353
        %1966 = vmatprep.subr.mxu0 0.0
        %1967 = vmatpush2.xpose.msra.mxu0 %v1350
        %1968 = vmatprep.subr.mxu0 0.0
        %1969 = vmatpush2.xpose.msra.mxu0 %v1347
        %1970 = vmatprep.subr.mxu0 0.0
        %1971 = vmatpush2.xpose.msra.mxu0 %v1344
        %1972 = vmatprep.subr.mxu0 0.0
        %1973 = vmatpush2.xpose.msra.mxu0 %v1341
        %1974 = vmatprep.subr.mxu0 0.0
        %1975 = vmatpush2.xpose.msra.mxu0 %v1338
        %1976 = vmatprep.subr.mxu0 0.0
        %1977 = vmatpush2.xpose.msra.mxu0 %v1335
        %1978 = vmatprep.subr.mxu0 0.0
        %1979 = vmatpush2.xpose.msra.mxu0 %v1332
        %1980 = vmatprep.subr.mxu0 0.0
        %1981 = vmatpush2.xpose.msra.mxu0 %v1329
        %1982 = vmatprep.subr.mxu0 0.0
        %1983 = vmatpush2.xpose.msra.mxu0 %v1326
        %1984 = vmatprep.mubr.f32.mxu0 0.0
        %1985 = vmatmul.mubr.f32.gmra.mxu0 %v795
        %v1986 = vpop.f32.mrf.mxu0
        %v1987 = vadd.f32 %v792, %v1986
        %v1988 = vpop.f32.mrf.mxu0
        %v1989 = vadd.f32 %v792, %v1988
        %1990 = vdwg.mxu0
        %1991 = vmatprep.subr.mxu0 0.0
        %1992 = vmatpush1.xpose.msra.mxu0 %v1419
        %1993 = vmatprep.subr.mxu0 0.0
        %1994 = vmatpush1.xpose.msra.mxu0 %v1416
        %1995 = vmatprep.subr.mxu0 0.0
        %1996 = vmatpush1.xpose.msra.mxu0 %v1413
        %1997 = vmatprep.subr.mxu0 0.0
        %1998 = vmatpush1.xpose.msra.mxu0 %v1410
        %1999 = vmatprep.subr.mxu0 0.0
        %2000 = vmatpush1.xpose.msra.mxu0 %v1407
        %2001 = vmatprep.subr.mxu0 0.0
        %2002 = vmatpush1.xpose.msra.mxu0 %v1404
        %2003 = vmatprep.subr.mxu0 0.0
        %2004 = vmatpush1.xpose.msra.mxu0 %v1401
        %2005 = vmatprep.subr.mxu0 0.0
        %2006 = vmatpush1.xpose.msra.mxu0 %v1398
        %2007 = vmatprep.subr.mxu0 0.0
        %2008 = vmatpush1.xpose.msra.mxu0 %v1395
        %2009 = vmatprep.subr.mxu0 0.0
        %2010 = vmatpush1.xpose.msra.mxu0 %v1392
        %2011 = vmatprep.subr.mxu0 0.0
        %2012 = vmatpush1.xpose.msra.mxu0 %v1389
        %2013 = vmatprep.subr.mxu0 0.0
        %2014 = vmatpush1.xpose.msra.mxu0 %v1386
        %2015 = vmatprep.subr.mxu0 0.0
        %2016 = vmatpush1.xpose.msra.mxu0 %v1383
        %2017 = vmatprep.subr.mxu0 0.0
        %2018 = vmatpush1.xpose.msra.mxu0 %v1380
        %2019 = vmatprep.subr.mxu0 0.0
        %2020 = vmatpush1.xpose.msra.mxu0 %v1377
        %2021 = vmatprep.subr.mxu0 0.0
        %2022 = vmatpush1.xpose.msra.mxu0 %v1374
        %2023 = vmatprep.subr.mxu0 0.0
        %2024 = vmatpush2.xpose.msra.mxu0 %v1467
        %2025 = vmatprep.subr.mxu0 0.0
        %2026 = vmatpush2.xpose.msra.mxu0 %v1464
        %2027 = vmatprep.subr.mxu0 0.0
        %2028 = vmatpush2.xpose.msra.mxu0 %v1461
        %2029 = vmatprep.subr.mxu0 0.0
        %2030 = vmatpush2.xpose.msra.mxu0 %v1458
        %2031 = vmatprep.subr.mxu0 0.0
        %2032 = vmatpush2.xpose.msra.mxu0 %v1455
        %2033 = vmatprep.subr.mxu0 0.0
        %2034 = vmatpush2.xpose.msra.mxu0 %v1452
        %2035 = vmatprep.subr.mxu0 0.0
        %2036 = vmatpush2.xpose.msra.mxu0 %v1449
        %2037 = vmatprep.subr.mxu0 0.0
        %2038 = vmatpush2.xpose.msra.mxu0 %v1446
        %2039 = vmatprep.subr.mxu0 0.0
        %2040 = vmatpush2.xpose.msra.mxu0 %v1443
        %2041 = vmatprep.subr.mxu0 0.0
        %2042 = vmatpush2.xpose.msra.mxu0 %v1440
        %2043 = vmatprep.subr.mxu0 0.0
        %2044 = vmatpush2.xpose.msra.mxu0 %v1437
        %2045 = vmatprep.subr.mxu0 0.0
        %2046 = vmatpush2.xpose.msra.mxu0 %v1434
        %2047 = vmatprep.subr.mxu0 0.0
        %2048 = vmatpush2.xpose.msra.mxu0 %v1431
        %2049 = vmatprep.subr.mxu0 0.0
        %2050 = vmatpush2.xpose.msra.mxu0 %v1428
        %2051 = vmatprep.subr.mxu0 0.0
        %2052 = vmatpush2.xpose.msra.mxu0 %v1425
        %2053 = vmatprep.subr.mxu0 0.0
        %2054 = vmatpush2.xpose.msra.mxu0 %v1422
        %2055 = vmatprep.mubr.f32.mxu0 0.0
        %2056 = vmatmul.mubr.f32.gmra.mxu0 %v795
        %v2057 = vpop.f32.mrf.mxu0
        %v2058 = vadd.f32 %v792, %v2057
        %v2059 = vpop.f32.mrf.mxu0
        %v2060 = vadd.f32 %v792, %v2059
        %2061 = vdwg.mxu0
        %2062 = vmatprep.subr.mxu0 0.0
        %2063 = vmatpush1.xpose.msra.mxu0 %v1515
        %2064 = vmatprep.subr.mxu0 0.0
        %2065 = vmatpush1.xpose.msra.mxu0 %v1512
        %2066 = vmatprep.subr.mxu0 0.0
        %2067 = vmatpush1.xpose.msra.mxu0 %v1509
        %2068 = vmatprep.subr.mxu0 0.0
        %2069 = vmatpush1.xpose.msra.mxu0 %v1506
        %2070 = vmatprep.subr.mxu0 0.0
        %2071 = vmatpush1.xpose.msra.mxu0 %v1503
        %2072 = vmatprep.subr.mxu0 0.0
        %2073 = vmatpush1.xpose.msra.mxu0 %v1500
        %2074 = vmatprep.subr.mxu0 0.0
        %2075 = vmatpush1.xpose.msra.mxu0 %v1497
        %2076 = vmatprep.subr.mxu0 0.0
        %2077 = vmatpush1.xpose.msra.mxu0 %v1494
        %2078 = vmatprep.subr.mxu0 0.0
        %2079 = vmatpush1.xpose.msra.mxu0 %v1491
        %2080 = vmatprep.subr.mxu0 0.0
        %2081 = vmatpush1.xpose.msra.mxu0 %v1488
        %2082 = vmatprep.subr.mxu0 0.0
        %2083 = vmatpush1.xpose.msra.mxu0 %v1485
        %2084 = vmatprep.subr.mxu0 0.0
        %2085 = vmatpush1.xpose.msra.mxu0 %v1482
        %2086 = vmatprep.subr.mxu0 0.0
        %2087 = vmatpush1.xpose.msra.mxu0 %v1479
        %2088 = vmatprep.subr.mxu0 0.0
        %2089 = vmatpush1.xpose.msra.mxu0 %v1476
        %2090 = vmatprep.subr.mxu0 0.0
        %2091 = vmatpush1.xpose.msra.mxu0 %v1473
        %2092 = vmatprep.subr.mxu0 0.0
        %2093 = vmatpush1.xpose.msra.mxu0 %v1470
        %2094 = vmatprep.subr.mxu0 0.0
        %2095 = vmatpush2.xpose.msra.mxu0 %v1563
        %2096 = vmatprep.subr.mxu0 0.0
        %2097 = vmatpush2.xpose.msra.mxu0 %v1560
        %2098 = vmatprep.subr.mxu0 0.0
        %2099 = vmatpush2.xpose.msra.mxu0 %v1557
        %2100 = vmatprep.subr.mxu0 0.0
        %2101 = vmatpush2.xpose.msra.mxu0 %v1554
        %2102 = vmatprep.subr.mxu0 0.0
        %2103 = vmatpush2.xpose.msra.mxu0 %v1551
        %2104 = vmatprep.subr.mxu0 0.0
        %2105 = vmatpush2.xpose.msra.mxu0 %v1548
        %2106 = vmatprep.subr.mxu0 0.0
        %2107 = vmatpush2.xpose.msra.mxu0 %v1545
        %2108 = vmatprep.subr.mxu0 0.0
        %2109 = vmatpush2.xpose.msra.mxu0 %v1542
        %2110 = vmatprep.subr.mxu0 0.0
        %2111 = vmatpush2.xpose.msra.mxu0 %v1539
        %2112 = vmatprep.subr.mxu0 0.0
        %2113 = vmatpush2.xpose.msra.mxu0 %v1536
        %2114 = vmatprep.subr.mxu0 0.0
        %2115 = vmatpush2.xpose.msra.mxu0 %v1533
        %2116 = vmatprep.subr.mxu0 0.0
        %2117 = vmatpush2.xpose.msra.mxu0 %v1530
        %2118 = vmatprep.subr.mxu0 0.0
        %2119 = vmatpush2.xpose.msra.mxu0 %v1527
        %2120 = vmatprep.subr.mxu0 0.0
        %2121 = vmatpush2.xpose.msra.mxu0 %v1524
        %2122 = vmatprep.subr.mxu0 0.0
        %2123 = vmatpush2.xpose.msra.mxu0 %v1521
        %2124 = vmatprep.subr.mxu0 0.0
        %2125 = vmatpush2.xpose.msra.mxu0 %v1518
        %2126 = vmatprep.mubr.f32.mxu0 0.0
        %2127 = vmatmul.mubr.f32.gmra.mxu0 %v795
        %v2128 = vpop.f32.mrf.mxu0
        %v2129 = vadd.f32 %v792, %v2128
        %v2130 = vpop.f32.mrf.mxu0
        %v2131 = vadd.f32 %v792, %v2130
        %2132 = vdwg.mxu0
        %v2134 = vsel %vm793, %v535, 0
        %v2137 = vsel %vm793, %v536, 0
        %v2140 = vsel %vm793, %v537, 0
        %v2143 = vsel %vm793, %v538, 0
        %v2146 = vsel %vm793, %v539, 0
        %v2149 = vsel %vm793, %v540, 0
        %v2152 = vsel %vm793, %v541, 0
        %v2155 = vsel %vm793, %v542, 0
        %v2158 = vsel %vm793, %v543, 0
        %v2161 = vsel %vm793, %v544, 0
        %v2164 = vsel %vm793, %v545, 0
        %v2167 = vsel %vm793, %v546, 0
        %v2170 = vsel %vm793, %v547, 0
        %v2173 = vsel %vm793, %v548, 0
        %v2176 = vsel %vm793, %v549, 0
        %v2179 = vsel %vm793, %v550, 0
        %v2182 = vsel %vm793, %v551, 0
        %v2185 = vsel %vm793, %v552, 0
        %v2188 = vsel %vm793, %v553, 0
        %v2191 = vsel %vm793, %v554, 0
        %v2194 = vsel %vm793, %v555, 0
        %v2197 = vsel %vm793, %v556, 0
        %v2200 = vsel %vm793, %v557, 0
        %v2203 = vsel %vm793, %v558, 0
        %v2206 = vsel %vm793, %v559, 0
        %v2209 = vsel %vm793, %v560, 0
        %v2212 = vsel %vm793, %v561, 0
        %v2215 = vsel %vm793, %v562, 0
        %v2218 = vsel %vm793, %v563, 0
        %v2221 = vsel %vm793, %v564, 0
        %v2224 = vsel %vm793, %v565, 0
        %v2227 = vsel %vm793, %v566, 0
        %v2230 = vsel %vm793, %v567, 0
        %v2233 = vsel %vm793, %v568, 0
        %v2236 = vsel %vm793, %v569, 0
        %v2239 = vsel %vm793, %v570, 0
        %v2242 = vsel %vm793, %v571, 0
        %v2245 = vsel %vm793, %v572, 0
        %v2248 = vsel %vm793, %v573, 0
        %v2251 = vsel %vm793, %v574, 0
        %v2254 = vsel %vm793, %v575, 0
        %v2257 = vsel %vm793, %v576, 0
        %v2260 = vsel %vm793, %v577, 0
        %v2263 = vsel %vm793, %v578, 0
        %v2266 = vsel %vm793, %v579, 0
        %v2269 = vsel %vm793, %v580, 0
        %v2272 = vsel %vm793, %v581, 0
        %v2275 = vsel %vm793, %v582, 0
        %v2278 = vsel %vm793, %v583, 0
        %v2281 = vsel %vm793, %v584, 0
        %v2284 = vsel %vm793, %v585, 0
        %v2287 = vsel %vm793, %v586, 0
        %v2290 = vsel %vm793, %v587, 0
        %v2293 = vsel %vm793, %v588, 0
        %v2296 = vsel %vm793, %v589, 0
        %v2299 = vsel %vm793, %v590, 0
        %v2302 = vsel %vm793, %v591, 0
        %v2305 = vsel %vm793, %v592, 0
        %v2308 = vsel %vm793, %v593, 0
        %v2311 = vsel %vm793, %v594, 0
        %v2314 = vsel %vm793, %v595, 0
        %v2317 = vsel %vm793, %v596, 0
        %v2320 = vsel %vm793, %v597, 0
        %v2323 = vsel %vm793, %v598, 0
        %v2326 = vsel %vm793, %v599, 0
        %v2329 = vsel %vm793, %v600, 0
        %v2332 = vsel %vm793, %v601, 0
        %v2335 = vsel %vm793, %v602, 0
        %v2338 = vsel %vm793, %v603, 0
        %v2341 = vsel %vm793, %v604, 0
        %v2344 = vsel %vm793, %v605, 0
        %v2347 = vsel %vm793, %v606, 0
        %v2350 = vsel %vm793, %v607, 0
        %v2353 = vsel %vm793, %v608, 0
        %v2356 = vsel %vm793, %v609, 0
        %v2359 = vsel %vm793, %v610, 0
        %v2362 = vsel %vm793, %v611, 0
        %v2365 = vsel %vm793, %v612, 0
        %v2368 = vsel %vm793, %v613, 0
        %v2371 = vsel %vm793, %v614, 0
        %v2374 = vsel %vm793, %v615, 0
        %v2377 = vsel %vm793, %v616, 0
        %v2380 = vsel %vm793, %v617, 0
        %v2383 = vsel %vm793, %v618, 0
        %v2386 = vsel %vm793, %v619, 0
        %v2389 = vsel %vm793, %v620, 0
        %v2392 = vsel %vm793, %v621, 0
        %v2395 = vsel %vm793, %v622, 0
        %v2398 = vsel %vm793, %v623, 0
        %v2401 = vsel %vm793, %v624, 0
        %v2404 = vsel %vm793, %v625, 0
        %v2407 = vsel %vm793, %v626, 0
        %v2410 = vsel %vm793, %v627, 0
        %v2413 = vsel %vm793, %v628, 0
        %v2416 = vsel %vm793, %v629, 0
        %v2419 = vsel %vm793, %v630, 0
        %v2422 = vsel %vm793, %v631, 0
        %v2425 = vsel %vm793, %v632, 0
        %v2428 = vsel %vm793, %v633, 0
        %v2431 = vsel %vm793, %v634, 0
        %v2434 = vsel %vm793, %v635, 0
        %v2437 = vsel %vm793, %v636, 0
        %v2440 = vsel %vm793, %v637, 0
        %v2443 = vsel %vm793, %v638, 0
        %v2446 = vsel %vm793, %v639, 0
        %v2449 = vsel %vm793, %v640, 0
        %v2452 = vsel %vm793, %v641, 0
        %v2455 = vsel %vm793, %v642, 0
        %v2458 = vsel %vm793, %v643, 0
        %v2461 = vsel %vm793, %v644, 0
        %v2464 = vsel %vm793, %v645, 0
        %v2467 = vsel %vm793, %v646, 0
        %v2470 = vsel %vm793, %v647, 0
        %v2473 = vsel %vm793, %v648, 0
        %v2476 = vsel %vm793, %v649, 0
        %v2479 = vsel %vm793, %v650, 0
        %v2482 = vsel %vm793, %v651, 0
        %v2485 = vsel %vm793, %v652, 0
        %v2488 = vsel %vm793, %v653, 0
        %v2491 = vsel %vm793, %v654, 0
        %v2494 = vsel %vm793, %v655, 0
        %v2497 = vsel %vm793, %v656, 0
        %v2500 = vsel %vm793, %v657, 0
        %v2503 = vsel %vm793, %v658, 0
        %v2506 = vsel %vm793, %v659, 0
        %v2509 = vsel %vm793, %v660, 0
        %v2512 = vsel %vm793, %v661, 0
        %v2515 = vsel %vm793, %v662, 0
        %v2518 = vsel %vm793, %v663, 0
        %v2521 = vsel %vm793, %v664, 0
        %v2524 = vsel %vm793, %v665, 0
        %v2527 = vsel %vm793, %v666, 0
        %v2530 = vsel %vm793, %v667, 0
        %v2533 = vsel %vm793, %v668, 0
        %v2536 = vsel %vm793, %v669, 0
        %v2539 = vsel %vm793, %v670, 0
        %v2542 = vsel %vm793, %v671, 0
        %v2545 = vsel %vm793, %v672, 0
        %v2548 = vsel %vm793, %v673, 0
        %v2551 = vsel %vm793, %v674, 0
        %v2554 = vsel %vm793, %v675, 0
        %v2557 = vsel %vm793, %v676, 0
        %v2560 = vsel %vm793, %v677, 0
        %v2563 = vsel %vm793, %v678, 0
        %v2566 = vsel %vm793, %v679, 0
        %v2569 = vsel %vm793, %v680, 0
        %v2572 = vsel %vm793, %v681, 0
        %v2575 = vsel %vm793, %v682, 0
        %v2578 = vsel %vm793, %v683, 0
        %v2581 = vsel %vm793, %v684, 0
        %v2584 = vsel %vm793, %v685, 0
        %v2587 = vsel %vm793, %v686, 0
        %v2590 = vsel %vm793, %v687, 0
        %v2593 = vsel %vm793, %v688, 0
        %v2596 = vsel %vm793, %v689, 0
        %v2599 = vsel %vm793, %v690, 0
        %v2602 = vsel %vm793, %v691, 0
        %v2605 = vsel %vm793, %v692, 0
        %v2608 = vsel %vm793, %v693, 0
        %v2611 = vsel %vm793, %v694, 0
        %v2614 = vsel %vm793, %v695, 0
        %v2617 = vsel %vm793, %v696, 0
        %v2620 = vsel %vm793, %v697, 0
        %v2623 = vsel %vm793, %v698, 0
        %v2626 = vsel %vm793, %v699, 0
        %v2629 = vsel %vm793, %v700, 0
        %v2632 = vsel %vm793, %v701, 0
        %v2635 = vsel %vm793, %v702, 0
        %v2638 = vsel %vm793, %v703, 0
        %v2641 = vsel %vm793, %v704, 0
        %v2644 = vsel %vm793, %v705, 0
        %v2647 = vsel %vm793, %v706, 0
        %v2650 = vsel %vm793, %v707, 0
        %v2653 = vsel %vm793, %v708, 0
        %v2656 = vsel %vm793, %v709, 0
        %v2659 = vsel %vm793, %v710, 0
        %v2662 = vsel %vm793, %v711, 0
        %v2665 = vsel %vm793, %v712, 0
        %v2668 = vsel %vm793, %v713, 0
        %v2671 = vsel %vm793, %v714, 0
        %v2674 = vsel %vm793, %v715, 0
        %v2677 = vsel %vm793, %v716, 0
        %v2680 = vsel %vm793, %v717, 0
        %v2683 = vsel %vm793, %v718, 0
        %v2686 = vsel %vm793, %v719, 0
        %v2689 = vsel %vm793, %v720, 0
        %v2692 = vsel %vm793, %v721, 0
        %v2695 = vsel %vm793, %v722, 0
        %v2698 = vsel %vm793, %v723, 0
        %v2701 = vsel %vm793, %v724, 0
        %v2704 = vsel %vm793, %v725, 0
        %v2707 = vsel %vm793, %v726, 0
        %v2710 = vsel %vm793, %v727, 0
        %v2713 = vsel %vm793, %v728, 0
        %v2716 = vsel %vm793, %v729, 0
        %v2719 = vsel %vm793, %v730, 0
        %v2722 = vsel %vm793, %v731, 0
        %v2725 = vsel %vm793, %v732, 0
        %v2728 = vsel %vm793, %v733, 0
        %v2731 = vsel %vm793, %v734, 0
        %v2734 = vsel %vm793, %v735, 0
        %v2737 = vsel %vm793, %v736, 0
        %v2740 = vsel %vm793, %v737, 0
        %v2743 = vsel %vm793, %v738, 0
        %v2746 = vsel %vm793, %v739, 0
        %v2749 = vsel %vm793, %v740, 0
        %v2752 = vsel %vm793, %v741, 0
        %v2755 = vsel %vm793, %v742, 0
        %v2758 = vsel %vm793, %v743, 0
        %v2761 = vsel %vm793, %v744, 0
        %v2764 = vsel %vm793, %v745, 0
        %v2767 = vsel %vm793, %v746, 0
        %v2770 = vsel %vm793, %v747, 0
        %v2773 = vsel %vm793, %v748, 0
        %v2776 = vsel %vm793, %v749, 0
        %v2779 = vsel %vm793, %v750, 0
        %v2782 = vsel %vm793, %v751, 0
        %v2785 = vsel %vm793, %v752, 0
        %v2788 = vsel %vm793, %v753, 0
        %v2791 = vsel %vm793, %v754, 0
        %v2794 = vsel %vm793, %v755, 0
        %v2797 = vsel %vm793, %v756, 0
        %v2800 = vsel %vm793, %v757, 0
        %v2803 = vsel %vm793, %v758, 0
        %v2806 = vsel %vm793, %v759, 0
        %v2809 = vsel %vm793, %v760, 0
        %v2812 = vsel %vm793, %v761, 0
        %v2815 = vsel %vm793, %v762, 0
        %v2818 = vsel %vm793, %v763, 0
        %v2821 = vsel %vm793, %v764, 0
        %v2824 = vsel %vm793, %v765, 0
        %v2827 = vsel %vm793, %v766, 0
        %v2830 = vsel %vm793, %v767, 0
        %v2833 = vsel %vm793, %v768, 0
        %v2836 = vsel %vm793, %v769, 0
        %v2839 = vsel %vm793, %v770, 0
        %v2842 = vsel %vm793, %v771, 0
        %v2845 = vsel %vm793, %v772, 0
        %v2848 = vsel %vm793, %v773, 0
        %v2851 = vsel %vm793, %v774, 0
        %v2854 = vsel %vm793, %v775, 0
        %v2857 = vsel %vm793, %v776, 0
        %v2860 = vsel %vm793, %v777, 0
        %v2863 = vsel %vm793, %v778, 0
        %v2866 = vsel %vm793, %v779, 0
        %v2869 = vsel %vm793, %v780, 0
        %v2872 = vsel %vm793, %v781, 0
        %v2875 = vsel %vm793, %v782, 0
        %v2878 = vsel %vm793, %v783, 0
        %v2881 = vsel %vm793, %v784, 0
        %v2884 = vsel %vm793, %v785, 0
        %v2887 = vsel %vm793, %v786, 0
        %v2890 = vsel %vm793, %v787, 0
        %v2893 = vsel %vm793, %v788, 0
        %v2896 = vsel %vm793, %v789, 0
        %v2899 = vsel %vm793, %v790, 0
        %2901 = vmatprep.subr.mxu0 0.0
        %2902 = vmatpush1.xpose.msra.mxu0 %v2179
        %2903 = vmatprep.subr.mxu0 0.0
        %2904 = vmatpush1.xpose.msra.mxu0 %v2176
        %2905 = vmatprep.subr.mxu0 0.0
        %2906 = vmatpush1.xpose.msra.mxu0 %v2173
        %2907 = vmatprep.subr.mxu0 0.0
        %2908 = vmatpush1.xpose.msra.mxu0 %v2170
        %2909 = vmatprep.subr.mxu0 0.0
        %2910 = vmatpush1.xpose.msra.mxu0 %v2167
        %2911 = vmatprep.subr.mxu0 0.0
        %2912 = vmatpush1.xpose.msra.mxu0 %v2164
        %2913 = vmatprep.subr.mxu0 0.0
        %2914 = vmatpush1.xpose.msra.mxu0 %v2161
        %2915 = vmatprep.subr.mxu0 0.0
        %2916 = vmatpush1.xpose.msra.mxu0 %v2158
        %2917 = vmatprep.subr.mxu0 0.0
        %2918 = vmatpush1.xpose.msra.mxu0 %v2155
        %2919 = vmatprep.subr.mxu0 0.0
        %2920 = vmatpush1.xpose.msra.mxu0 %v2152
        %2921 = vmatprep.subr.mxu0 0.0
        %2922 = vmatpush1.xpose.msra.mxu0 %v2149
        %2923 = vmatprep.subr.mxu0 0.0
        %2924 = vmatpush1.xpose.msra.mxu0 %v2146
        %2925 = vmatprep.subr.mxu0 0.0
        %2926 = vmatpush1.xpose.msra.mxu0 %v2143
        %2927 = vmatprep.subr.mxu0 0.0
        %2928 = vmatpush1.xpose.msra.mxu0 %v2140
        %2929 = vmatprep.subr.mxu0 0.0
        %2930 = vmatpush1.xpose.msra.mxu0 %v2137
        %2931 = vmatprep.subr.mxu0 0.0
        %2932 = vmatpush1.xpose.msra.mxu0 %v2134
        %2933 = vmatprep.subr.mxu0 0.0
        %2934 = vmatpush2.xpose.msra.mxu0 %v2227
        %2935 = vmatprep.subr.mxu0 0.0
        %2936 = vmatpush2.xpose.msra.mxu0 %v2224
        %2937 = vmatprep.subr.mxu0 0.0
        %2938 = vmatpush2.xpose.msra.mxu0 %v2221
        %2939 = vmatprep.subr.mxu0 0.0
        %2940 = vmatpush2.xpose.msra.mxu0 %v2218
        %2941 = vmatprep.subr.mxu0 0.0
        %2942 = vmatpush2.xpose.msra.mxu0 %v2215
        %2943 = vmatprep.subr.mxu0 0.0
        %2944 = vmatpush2.xpose.msra.mxu0 %v2212
        %2945 = vmatprep.subr.mxu0 0.0
        %2946 = vmatpush2.xpose.msra.mxu0 %v2209
        %2947 = vmatprep.subr.mxu0 0.0
        %2948 = vmatpush2.xpose.msra.mxu0 %v2206
        %2949 = vmatprep.subr.mxu0 0.0
        %2950 = vmatpush2.xpose.msra.mxu0 %v2203
        %2951 = vmatprep.subr.mxu0 0.0
        %2952 = vmatpush2.xpose.msra.mxu0 %v2200
        %2953 = vmatprep.subr.mxu0 0.0
        %2954 = vmatpush2.xpose.msra.mxu0 %v2197
        %2955 = vmatprep.subr.mxu0 0.0
        %2956 = vmatpush2.xpose.msra.mxu0 %v2194
        %2957 = vmatprep.subr.mxu0 0.0
        %2958 = vmatpush2.xpose.msra.mxu0 %v2191
        %2959 = vmatprep.subr.mxu0 0.0
        %2960 = vmatpush2.xpose.msra.mxu0 %v2188
        %2961 = vmatprep.subr.mxu0 0.0
        %2962 = vmatpush2.xpose.msra.mxu0 %v2185
        %2963 = vmatprep.subr.mxu0 0.0
        %2964 = vmatpush2.xpose.msra.mxu0 %v2182
        %2965 = vmatprep.mubr.f32.mxu0 0.0
        %2966 = vmatmul.mubr.f32.gmra.mxu0 %v795
        %v2967 = vpop.f32.mrf.mxu0
        %v2968 = vadd.f32 %v792, %v2967
        %v2969 = vpop.f32.mrf.mxu0
        %v2970 = vadd.f32 %v792, %v2969
        %2971 = vdwg.mxu0
        %2972 = vmatprep.subr.mxu0 0.0
        %2973 = vmatpush1.xpose.msra.mxu0 %v2275
        %2974 = vmatprep.subr.mxu0 0.0
        %2975 = vmatpush1.xpose.msra.mxu0 %v2272
        %2976 = vmatprep.subr.mxu0 0.0
        %2977 = vmatpush1.xpose.msra.mxu0 %v2269
        %2978 = vmatprep.subr.mxu0 0.0
        %2979 = vmatpush1.xpose.msra.mxu0 %v2266
        %2980 = vmatprep.subr.mxu0 0.0
        %2981 = vmatpush1.xpose.msra.mxu0 %v2263
        %2982 = vmatprep.subr.mxu0 0.0
        %2983 = vmatpush1.xpose.msra.mxu0 %v2260
        %2984 = vmatprep.subr.mxu0 0.0
        %2985 = vmatpush1.xpose.msra.mxu0 %v2257
        %2986 = vmatprep.subr.mxu0 0.0
        %2987 = vmatpush1.xpose.msra.mxu0 %v2254
        %2988 = vmatprep.subr.mxu0 0.0
        %2989 = vmatpush1.xpose.msra.mxu0 %v2251
        %2990 = vmatprep.subr.mxu0 0.0
        %2991 = vmatpush1.xpose.msra.mxu0 %v2248
        %2992 = vmatprep.subr.mxu0 0.0
        %2993 = vmatpush1.xpose.msra.mxu0 %v2245
        %2994 = vmatprep.subr.mxu0 0.0
        %2995 = vmatpush1.xpose.msra.mxu0 %v2242
        %2996 = vmatprep.subr.mxu0 0.0
        %2997 = vmatpush1.xpose.msra.mxu0 %v2239
        %2998 = vmatprep.subr.mxu0 0.0
        %2999 = vmatpush1.xpose.msra.mxu0 %v2236
        %3000 = vmatprep.subr.mxu0 0.0
        %3001 = vmatpush1.xpose.msra.mxu0 %v2233
        %3002 = vmatprep.subr.mxu0 0.0
        %3003 = vmatpush1.xpose.msra.mxu0 %v2230
        %3004 = vmatprep.subr.mxu0 0.0
        %3005 = vmatpush2.xpose.msra.mxu0 %v2323
        %3006 = vmatprep.subr.mxu0 0.0
        %3007 = vmatpush2.xpose.msra.mxu0 %v2320
        %3008 = vmatprep.subr.mxu0 0.0
        %3009 = vmatpush2.xpose.msra.mxu0 %v2317
        %3010 = vmatprep.subr.mxu0 0.0
        %3011 = vmatpush2.xpose.msra.mxu0 %v2314
        %3012 = vmatprep.subr.mxu0 0.0
        %3013 = vmatpush2.xpose.msra.mxu0 %v2311
        %3014 = vmatprep.subr.mxu0 0.0
        %3015 = vmatpush2.xpose.msra.mxu0 %v2308
        %3016 = vmatprep.subr.mxu0 0.0
        %3017 = vmatpush2.xpose.msra.mxu0 %v2305
        %3018 = vmatprep.subr.mxu0 0.0
        %3019 = vmatpush2.xpose.msra.mxu0 %v2302
        %3020 = vmatprep.subr.mxu0 0.0
        %3021 = vmatpush2.xpose.msra.mxu0 %v2299
        %3022 = vmatprep.subr.mxu0 0.0
        %3023 = vmatpush2.xpose.msra.mxu0 %v2296
        %3024 = vmatprep.subr.mxu0 0.0
        %3025 = vmatpush2.xpose.msra.mxu0 %v2293
        %3026 = vmatprep.subr.mxu0 0.0
        %3027 = vmatpush2.xpose.msra.mxu0 %v2290
        %3028 = vmatprep.subr.mxu0 0.0
        %3029 = vmatpush2.xpose.msra.mxu0 %v2287
        %3030 = vmatprep.subr.mxu0 0.0
        %3031 = vmatpush2.xpose.msra.mxu0 %v2284
        %3032 = vmatprep.subr.mxu0 0.0
        %3033 = vmatpush2.xpose.msra.mxu0 %v2281
        %3034 = vmatprep.subr.mxu0 0.0
        %3035 = vmatpush2.xpose.msra.mxu0 %v2278
        %3036 = vmatprep.mubr.f32.mxu0 0.0
        %3037 = vmatmul.mubr.f32.gmra.mxu0 %v795
        %v3038 = vpop.f32.mrf.mxu0
        %v3039 = vadd.f32 %v792, %v3038
        %v3040 = vpop.f32.mrf.mxu0
        %v3041 = vadd.f32 %v792, %v3040
        %3042 = vdwg.mxu0
        %3043 = vmatprep.subr.mxu0 0.0
        %3044 = vmatpush1.xpose.msra.mxu0 %v2371
        %3045 = vmatprep.subr.mxu0 0.0
        %3046 = vmatpush1.xpose.msra.mxu0 %v2368
        %3047 = vmatprep.subr.mxu0 0.0
        %3048 = vmatpush1.xpose.msra.mxu0 %v2365
        %3049 = vmatprep.subr.mxu0 0.0
        %3050 = vmatpush1.xpose.msra.mxu0 %v2362
        %3051 = vmatprep.subr.mxu0 0.0
        %3052 = vmatpush1.xpose.msra.mxu0 %v2359
        %3053 = vmatprep.subr.mxu0 0.0
        %3054 = vmatpush1.xpose.msra.mxu0 %v2356
        %3055 = vmatprep.subr.mxu0 0.0
        %3056 = vmatpush1.xpose.msra.mxu0 %v2353
        %3057 = vmatprep.subr.mxu0 0.0
        %3058 = vmatpush1.xpose.msra.mxu0 %v2350
        %3059 = vmatprep.subr.mxu0 0.0
        %3060 = vmatpush1.xpose.msra.mxu0 %v2347
        %3061 = vmatprep.subr.mxu0 0.0
        %3062 = vmatpush1.xpose.msra.mxu0 %v2344
        %3063 = vmatprep.subr.mxu0 0.0
        %3064 = vmatpush1.xpose.msra.mxu0 %v2341
        %3065 = vmatprep.subr.mxu0 0.0
        %3066 = vmatpush1.xpose.msra.mxu0 %v2338
        %3067 = vmatprep.subr.mxu0 0.0
        %3068 = vmatpush1.xpose.msra.mxu0 %v2335
        %3069 = vmatprep.subr.mxu0 0.0
        %3070 = vmatpush1.xpose.msra.mxu0 %v2332
        %3071 = vmatprep.subr.mxu0 0.0
        %3072 = vmatpush1.xpose.msra.mxu0 %v2329
        %3073 = vmatprep.subr.mxu0 0.0
        %3074 = vmatpush1.xpose.msra.mxu0 %v2326
        %3075 = vmatprep.subr.mxu0 0.0
        %3076 = vmatpush2.xpose.msra.mxu0 %v2419
        %3077 = vmatprep.subr.mxu0 0.0
        %3078 = vmatpush2.xpose.msra.mxu0 %v2416
        %3079 = vmatprep.subr.mxu0 0.0
        %3080 = vmatpush2.xpose.msra.mxu0 %v2413
        %3081 = vmatprep.subr.mxu0 0.0
        %3082 = vmatpush2.xpose.msra.mxu0 %v2410
        %3083 = vmatprep.subr.mxu0 0.0
        %3084 = vmatpush2.xpose.msra.mxu0 %v2407
        %3085 = vmatprep.subr.mxu0 0.0
        %3086 = vmatpush2.xpose.msra.mxu0 %v2404
        %3087 = vmatprep.subr.mxu0 0.0
        %3088 = vmatpush2.xpose.msra.mxu0 %v2401
        %3089 = vmatprep.subr.mxu0 0.0
        %3090 = vmatpush2.xpose.msra.mxu0 %v2398
        %3091 = vmatprep.subr.mxu0 0.0
        %3092 = vmatpush2.xpose.msra.mxu0 %v2395
        %3093 = vmatprep.subr.mxu0 0.0
        %3094 = vmatpush2.xpose.msra.mxu0 %v2392
        %3095 = vmatprep.subr.mxu0 0.0
        %3096 = vmatpush2.xpose.msra.mxu0 %v2389
        %3097 = vmatprep.subr.mxu0 0.0
        %3098 = vmatpush2.xpose.msra.mxu0 %v2386
        %3099 = vmatprep.subr.mxu0 0.0
        %3100 = vmatpush2.xpose.msra.mxu0 %v2383
        %3101 = vmatprep.subr.mxu0 0.0
        %3102 = vmatpush2.xpose.msra.mxu0 %v2380
        %3103 = vmatprep.subr.mxu0 0.0
        %3104 = vmatpush2.xpose.msra.mxu0 %v2377
        %3105 = vmatprep.subr.mxu0 0.0
        %3106 = vmatpush2.xpose.msra.mxu0 %v2374
        %3107 = vmatprep.mubr.f32.mxu0 0.0
        %3108 = vmatmul.mubr.f32.gmra.mxu0 %v795
        %v3109 = vpop.f32.mrf.mxu0
        %v3110 = vadd.f32 %v792, %v3109
        %v3111 = vpop.f32.mrf.mxu0
        %v3112 = vadd.f32 %v792, %v3111
        %3113 = vdwg.mxu0
        %3114 = vmatprep.subr.mxu0 0.0
        %3115 = vmatpush1.xpose.msra.mxu0 %v2467
        %3116 = vmatprep.subr.mxu0 0.0
        %3117 = vmatpush1.xpose.msra.mxu0 %v2464
        %3118 = vmatprep.subr.mxu0 0.0
        %3119 = vmatpush1.xpose.msra.mxu0 %v2461
        %3120 = vmatprep.subr.mxu0 0.0
        %3121 = vmatpush1.xpose.msra.mxu0 %v2458
        %3122 = vmatprep.subr.mxu0 0.0
        %3123 = vmatpush1.xpose.msra.mxu0 %v2455
        %3124 = vmatprep.subr.mxu0 0.0
        %3125 = vmatpush1.xpose.msra.mxu0 %v2452
        %3126 = vmatprep.subr.mxu0 0.0
        %3127 = vmatpush1.xpose.msra.mxu0 %v2449
        %3128 = vmatprep.subr.mxu0 0.0
        %3129 = vmatpush1.xpose.msra.mxu0 %v2446
        %3130 = vmatprep.subr.mxu0 0.0
        %3131 = vmatpush1.xpose.msra.mxu0 %v2443
        %3132 = vmatprep.subr.mxu0 0.0
        %3133 = vmatpush1.xpose.msra.mxu0 %v2440
        %3134 = vmatprep.subr.mxu0 0.0
        %3135 = vmatpush1.xpose.msra.mxu0 %v2437
        %3136 = vmatprep.subr.mxu0 0.0
        %3137 = vmatpush1.xpose.msra.mxu0 %v2434
        %3138 = vmatprep.subr.mxu0 0.0
        %3139 = vmatpush1.xpose.msra.mxu0 %v2431
        %3140 = vmatprep.subr.mxu0 0.0
        %3141 = vmatpush1.xpose.msra.mxu0 %v2428
        %3142 = vmatprep.subr.mxu0 0.0
        %3143 = vmatpush1.xpose.msra.mxu0 %v2425
        %3144 = vmatprep.subr.mxu0 0.0
        %3145 = vmatpush1.xpose.msra.mxu0 %v2422
        %3146 = vmatprep.subr.mxu0 0.0
        %3147 = vmatpush2.xpose.msra.mxu0 %v2515
        %3148 = vmatprep.subr.mxu0 0.0
        %3149 = vmatpush2.xpose.msra.mxu0 %v2512
        %3150 = vmatprep.subr.mxu0 0.0
        %3151 = vmatpush2.xpose.msra.mxu0 %v2509
        %3152 = vmatprep.subr.mxu0 0.0
        %3153 = vmatpush2.xpose.msra.mxu0 %v2506
        %3154 = vmatprep.subr.mxu0 0.0
        %3155 = vmatpush2.xpose.msra.mxu0 %v2503
        %3156 = vmatprep.subr.mxu0 0.0
        %3157 = vmatpush2.xpose.msra.mxu0 %v2500
        %3158 = vmatprep.subr.mxu0 0.0
        %3159 = vmatpush2.xpose.msra.mxu0 %v2497
        %3160 = vmatprep.subr.mxu0 0.0
        %3161 = vmatpush2.xpose.msra.mxu0 %v2494
        %3162 = vmatprep.subr.mxu0 0.0
        %3163 = vmatpush2.xpose.msra.mxu0 %v2491
        %3164 = vmatprep.subr.mxu0 0.0
        %3165 = vmatpush2.xpose.msra.mxu0 %v2488
        %3166 = vmatprep.subr.mxu0 0.0
        %3167 = vmatpush2.xpose.msra.mxu0 %v2485
        %3168 = vmatprep.subr.mxu0 0.0
        %3169 = vmatpush2.xpose.msra.mxu0 %v2482
        %3170 = vmatprep.subr.mxu0 0.0
        %3171 = vmatpush2.xpose.msra.mxu0 %v2479
        %3172 = vmatprep.subr.mxu0 0.0
        %3173 = vmatpush2.xpose.msra.mxu0 %v2476
        %3174 = vmatprep.subr.mxu0 0.0
        %3175 = vmatpush2.xpose.msra.mxu0 %v2473
        %3176 = vmatprep.subr.mxu0 0.0
        %3177 = vmatpush2.xpose.msra.mxu0 %v2470
        %3178 = vmatprep.mubr.f32.mxu0 0.0
        %3179 = vmatmul.mubr.f32.gmra.mxu0 %v795
        %v3180 = vpop.f32.mrf.mxu0
        %v3181 = vadd.f32 %v792, %v3180
        %v3182 = vpop.f32.mrf.mxu0
        %v3183 = vadd.f32 %v792, %v3182
        %3184 = vdwg.mxu0
        %3185 = vmatprep.subr.mxu0 0.0
        %3186 = vmatpush1.xpose.msra.mxu0 %v2563
        %3187 = vmatprep.subr.mxu0 0.0
        %3188 = vmatpush1.xpose.msra.mxu0 %v2560
        %3189 = vmatprep.subr.mxu0 0.0
        %3190 = vmatpush1.xpose.msra.mxu0 %v2557
        %3191 = vmatprep.subr.mxu0 0.0
        %3192 = vmatpush1.xpose.msra.mxu0 %v2554
        %3193 = vmatprep.subr.mxu0 0.0
        %3194 = vmatpush1.xpose.msra.mxu0 %v2551
        %3195 = vmatprep.subr.mxu0 0.0
        %3196 = vmatpush1.xpose.msra.mxu0 %v2548
        %3197 = vmatprep.subr.mxu0 0.0
        %3198 = vmatpush1.xpose.msra.mxu0 %v2545
        %3199 = vmatprep.subr.mxu0 0.0
        %3200 = vmatpush1.xpose.msra.mxu0 %v2542
        %3201 = vmatprep.subr.mxu0 0.0
        %3202 = vmatpush1.xpose.msra.mxu0 %v2539
        %3203 = vmatprep.subr.mxu0 0.0
        %3204 = vmatpush1.xpose.msra.mxu0 %v2536
        %3205 = vmatprep.subr.mxu0 0.0
        %3206 = vmatpush1.xpose.msra.mxu0 %v2533
        %3207 = vmatprep.subr.mxu0 0.0
        %3208 = vmatpush1.xpose.msra.mxu0 %v2530
        %3209 = vmatprep.subr.mxu0 0.0
        %3210 = vmatpush1.xpose.msra.mxu0 %v2527
        %3211 = vmatprep.subr.mxu0 0.0
        %3212 = vmatpush1.xpose.msra.mxu0 %v2524
        %3213 = vmatprep.subr.mxu0 0.0
        %3214 = vmatpush1.xpose.msra.mxu0 %v2521
        %3215 = vmatprep.subr.mxu0 0.0
        %3216 = vmatpush1.xpose.msra.mxu0 %v2518
        %3217 = vmatprep.subr.mxu0 0.0
        %3218 = vmatpush2.xpose.msra.mxu0 %v2611
        %3219 = vmatprep.subr.mxu0 0.0
        %3220 = vmatpush2.xpose.msra.mxu0 %v2608
        %3221 = vmatprep.subr.mxu0 0.0
        %3222 = vmatpush2.xpose.msra.mxu0 %v2605
        %3223 = vmatprep.subr.mxu0 0.0
        %3224 = vmatpush2.xpose.msra.mxu0 %v2602
        %3225 = vmatprep.subr.mxu0 0.0
        %3226 = vmatpush2.xpose.msra.mxu0 %v2599
        %3227 = vmatprep.subr.mxu0 0.0
        %3228 = vmatpush2.xpose.msra.mxu0 %v2596
        %3229 = vmatprep.subr.mxu0 0.0
        %3230 = vmatpush2.xpose.msra.mxu0 %v2593
        %3231 = vmatprep.subr.mxu0 0.0
        %3232 = vmatpush2.xpose.msra.mxu0 %v2590
        %3233 = vmatprep.subr.mxu0 0.0
        %3234 = vmatpush2.xpose.msra.mxu0 %v2587
        %3235 = vmatprep.subr.mxu0 0.0
        %3236 = vmatpush2.xpose.msra.mxu0 %v2584
        %3237 = vmatprep.subr.mxu0 0.0
        %3238 = vmatpush2.xpose.msra.mxu0 %v2581
        %3239 = vmatprep.subr.mxu0 0.0
        %3240 = vmatpush2.xpose.msra.mxu0 %v2578
        %3241 = vmatprep.subr.mxu0 0.0
        %3242 = vmatpush2.xpose.msra.mxu0 %v2575
        %3243 = vmatprep.subr.mxu0 0.0
        %3244 = vmatpush2.xpose.msra.mxu0 %v2572
        %3245 = vmatprep.subr.mxu0 0.0
        %3246 = vmatpush2.xpose.msra.mxu0 %v2569
        %3247 = vmatprep.subr.mxu0 0.0
        %3248 = vmatpush2.xpose.msra.mxu0 %v2566
        %3249 = vmatprep.mubr.f32.mxu0 0.0
        %3250 = vmatmul.mubr.f32.gmra.mxu0 %v795
        %v3251 = vpop.f32.mrf.mxu0
        %v3252 = vadd.f32 %v792, %v3251
        %v3253 = vpop.f32.mrf.mxu0
        %v3254 = vadd.f32 %v792, %v3253
        %3255 = vdwg.mxu0
        %3256 = vmatprep.subr.mxu0 0.0
        %3257 = vmatpush1.xpose.msra.mxu0 %v2659
        %3258 = vmatprep.subr.mxu0 0.0
        %3259 = vmatpush1.xpose.msra.mxu0 %v2656
        %3260 = vmatprep.subr.mxu0 0.0
        %3261 = vmatpush1.xpose.msra.mxu0 %v2653
        %3262 = vmatprep.subr.mxu0 0.0
        %3263 = vmatpush1.xpose.msra.mxu0 %v2650
        %3264 = vmatprep.subr.mxu0 0.0
        %3265 = vmatpush1.xpose.msra.mxu0 %v2647
        %3266 = vmatprep.subr.mxu0 0.0
        %3267 = vmatpush1.xpose.msra.mxu0 %v2644
        %3268 = vmatprep.subr.mxu0 0.0
        %3269 = vmatpush1.xpose.msra.mxu0 %v2641
        %3270 = vmatprep.subr.mxu0 0.0
        %3271 = vmatpush1.xpose.msra.mxu0 %v2638
        %3272 = vmatprep.subr.mxu0 0.0
        %3273 = vmatpush1.xpose.msra.mxu0 %v2635
        %3274 = vmatprep.subr.mxu0 0.0
        %3275 = vmatpush1.xpose.msra.mxu0 %v2632
        %3276 = vmatprep.subr.mxu0 0.0
        %3277 = vmatpush1.xpose.msra.mxu0 %v2629
        %3278 = vmatprep.subr.mxu0 0.0
        %3279 = vmatpush1.xpose.msra.mxu0 %v2626
        %3280 = vmatprep.subr.mxu0 0.0
        %3281 = vmatpush1.xpose.msra.mxu0 %v2623
        %3282 = vmatprep.subr.mxu0 0.0
        %3283 = vmatpush1.xpose.msra.mxu0 %v2620
        %3284 = vmatprep.subr.mxu0 0.0
        %3285 = vmatpush1.xpose.msra.mxu0 %v2617
        %3286 = vmatprep.subr.mxu0 0.0
        %3287 = vmatpush1.xpose.msra.mxu0 %v2614
        %3288 = vmatprep.subr.mxu0 0.0
        %3289 = vmatpush2.xpose.msra.mxu0 %v2707
        %3290 = vmatprep.subr.mxu0 0.0
        %3291 = vmatpush2.xpose.msra.mxu0 %v2704
        %3292 = vmatprep.subr.mxu0 0.0
        %3293 = vmatpush2.xpose.msra.mxu0 %v2701
        %3294 = vmatprep.subr.mxu0 0.0
        %3295 = vmatpush2.xpose.msra.mxu0 %v2698
        %3296 = vmatprep.subr.mxu0 0.0
        %3297 = vmatpush2.xpose.msra.mxu0 %v2695
        %3298 = vmatprep.subr.mxu0 0.0
        %3299 = vmatpush2.xpose.msra.mxu0 %v2692
        %3300 = vmatprep.subr.mxu0 0.0
        %3301 = vmatpush2.xpose.msra.mxu0 %v2689
        %3302 = vmatprep.subr.mxu0 0.0
        %3303 = vmatpush2.xpose.msra.mxu0 %v2686
        %3304 = vmatprep.subr.mxu0 0.0
        %3305 = vmatpush2.xpose.msra.mxu0 %v2683
        %3306 = vmatprep.subr.mxu0 0.0
        %3307 = vmatpush2.xpose.msra.mxu0 %v2680
        %3308 = vmatprep.subr.mxu0 0.0
        %3309 = vmatpush2.xpose.msra.mxu0 %v2677
        %3310 = vmatprep.subr.mxu0 0.0
        %3311 = vmatpush2.xpose.msra.mxu0 %v2674
        %3312 = vmatprep.subr.mxu0 0.0
        %3313 = vmatpush2.xpose.msra.mxu0 %v2671
        %3314 = vmatprep.subr.mxu0 0.0
        %3315 = vmatpush2.xpose.msra.mxu0 %v2668
        %3316 = vmatprep.subr.mxu0 0.0
        %3317 = vmatpush2.xpose.msra.mxu0 %v2665
        %3318 = vmatprep.subr.mxu0 0.0
        %3319 = vmatpush2.xpose.msra.mxu0 %v2662
        %3320 = vmatprep.mubr.f32.mxu0 0.0
        %3321 = vmatmul.mubr.f32.gmra.mxu0 %v795
        %v3322 = vpop.f32.mrf.mxu0
        %v3323 = vadd.f32 %v792, %v3322
        %v3324 = vpop.f32.mrf.mxu0
        %v3325 = vadd.f32 %v792, %v3324
        %3326 = vdwg.mxu0
        %3327 = vmatprep.subr.mxu0 0.0
        %3328 = vmatpush1.xpose.msra.mxu0 %v2755
        %3329 = vmatprep.subr.mxu0 0.0
        %3330 = vmatpush1.xpose.msra.mxu0 %v2752
        %3331 = vmatprep.subr.mxu0 0.0
        %3332 = vmatpush1.xpose.msra.mxu0 %v2749
        %3333 = vmatprep.subr.mxu0 0.0
        %3334 = vmatpush1.xpose.msra.mxu0 %v2746
        %3335 = vmatprep.subr.mxu0 0.0
        %3336 = vmatpush1.xpose.msra.mxu0 %v2743
        %3337 = vmatprep.subr.mxu0 0.0
        %3338 = vmatpush1.xpose.msra.mxu0 %v2740
        %3339 = vmatprep.subr.mxu0 0.0
        %3340 = vmatpush1.xpose.msra.mxu0 %v2737
        %3341 = vmatprep.subr.mxu0 0.0
        %3342 = vmatpush1.xpose.msra.mxu0 %v2734
        %3343 = vmatprep.subr.mxu0 0.0
        %3344 = vmatpush1.xpose.msra.mxu0 %v2731
        %3345 = vmatprep.subr.mxu0 0.0
        %3346 = vmatpush1.xpose.msra.mxu0 %v2728
        %3347 = vmatprep.subr.mxu0 0.0
        %3348 = vmatpush1.xpose.msra.mxu0 %v2725
        %3349 = vmatprep.subr.mxu0 0.0
        %3350 = vmatpush1.xpose.msra.mxu0 %v2722
        %3351 = vmatprep.subr.mxu0 0.0
        %3352 = vmatpush1.xpose.msra.mxu0 %v2719
        %3353 = vmatprep.subr.mxu0 0.0
        %3354 = vmatpush1.xpose.msra.mxu0 %v2716
        %3355 = vmatprep.subr.mxu0 0.0
        %3356 = vmatpush1.xpose.msra.mxu0 %v2713
        %3357 = vmatprep.subr.mxu0 0.0
        %3358 = vmatpush1.xpose.msra.mxu0 %v2710
        %3359 = vmatprep.subr.mxu0 0.0
        %3360 = vmatpush2.xpose.msra.mxu0 %v2803
        %3361 = vmatprep.subr.mxu0 0.0
        %3362 = vmatpush2.xpose.msra.mxu0 %v2800
        %3363 = vmatprep.subr.mxu0 0.0
        %3364 = vmatpush2.xpose.msra.mxu0 %v2797
        %3365 = vmatprep.subr.mxu0 0.0
        %3366 = vmatpush2.xpose.msra.mxu0 %v2794
        %3367 = vmatprep.subr.mxu0 0.0
        %3368 = vmatpush2.xpose.msra.mxu0 %v2791
        %3369 = vmatprep.subr.mxu0 0.0
        %3370 = vmatpush2.xpose.msra.mxu0 %v2788
        %3371 = vmatprep.subr.mxu0 0.0
        %3372 = vmatpush2.xpose.msra.mxu0 %v2785
        %3373 = vmatprep.subr.mxu0 0.0
        %3374 = vmatpush2.xpose.msra.mxu0 %v2782
        %3375 = vmatprep.subr.mxu0 0.0
        %3376 = vmatpush2.xpose.msra.mxu0 %v2779
        %3377 = vmatprep.subr.mxu0 0.0
        %3378 = vmatpush2.xpose.msra.mxu0 %v2776
        %3379 = vmatprep.subr.mxu0 0.0
        %3380 = vmatpush2.xpose.msra.mxu0 %v2773
        %3381 = vmatprep.subr.mxu0 0.0
        %3382 = vmatpush2.xpose.msra.mxu0 %v2770
        %3383 = vmatprep.subr.mxu0 0.0
        %3384 = vmatpush2.xpose.msra.mxu0 %v2767
        %3385 = vmatprep.subr.mxu0 0.0
        %3386 = vmatpush2.xpose.msra.mxu0 %v2764
        %3387 = vmatprep.subr.mxu0 0.0
        %3388 = vmatpush2.xpose.msra.mxu0 %v2761
        %3389 = vmatprep.subr.mxu0 0.0
        %3390 = vmatpush2.xpose.msra.mxu0 %v2758
        %3391 = vmatprep.mubr.f32.mxu0 0.0
        %3392 = vmatmul.mubr.f32.gmra.mxu0 %v795
        %v3393 = vpop.f32.mrf.mxu0
        %v3394 = vadd.f32 %v792, %v3393
        %v3395 = vpop.f32.mrf.mxu0
        %v3396 = vadd.f32 %v792, %v3395
        %3397 = vdwg.mxu0
        %3398 = vmatprep.subr.mxu0 0.0
        %3399 = vmatpush1.xpose.msra.mxu0 %v2851
        %3400 = vmatprep.subr.mxu0 0.0
        %3401 = vmatpush1.xpose.msra.mxu0 %v2848
        %3402 = vmatprep.subr.mxu0 0.0
        %3403 = vmatpush1.xpose.msra.mxu0 %v2845
        %3404 = vmatprep.subr.mxu0 0.0
        %3405 = vmatpush1.xpose.msra.mxu0 %v2842
        %3406 = vmatprep.subr.mxu0 0.0
        %3407 = vmatpush1.xpose.msra.mxu0 %v2839
        %3408 = vmatprep.subr.mxu0 0.0
        %3409 = vmatpush1.xpose.msra.mxu0 %v2836
        %3410 = vmatprep.subr.mxu0 0.0
        %3411 = vmatpush1.xpose.msra.mxu0 %v2833
        %3412 = vmatprep.subr.mxu0 0.0
        %3413 = vmatpush1.xpose.msra.mxu0 %v2830
        %3414 = vmatprep.subr.mxu0 0.0
        %3415 = vmatpush1.xpose.msra.mxu0 %v2827
        %3416 = vmatprep.subr.mxu0 0.0
        %3417 = vmatpush1.xpose.msra.mxu0 %v2824
        %3418 = vmatprep.subr.mxu0 0.0
        %3419 = vmatpush1.xpose.msra.mxu0 %v2821
        %3420 = vmatprep.subr.mxu0 0.0
        %3421 = vmatpush1.xpose.msra.mxu0 %v2818
        %3422 = vmatprep.subr.mxu0 0.0
        %3423 = vmatpush1.xpose.msra.mxu0 %v2815
        %3424 = vmatprep.subr.mxu0 0.0
        %3425 = vmatpush1.xpose.msra.mxu0 %v2812
        %3426 = vmatprep.subr.mxu0 0.0
        %3427 = vmatpush1.xpose.msra.mxu0 %v2809
        %3428 = vmatprep.subr.mxu0 0.0
        %3429 = vmatpush1.xpose.msra.mxu0 %v2806
        %3430 = vmatprep.subr.mxu0 0.0
        %3431 = vmatpush2.xpose.msra.mxu0 %v2899
        %3432 = vmatprep.subr.mxu0 0.0
        %3433 = vmatpush2.xpose.msra.mxu0 %v2896
        %3434 = vmatprep.subr.mxu0 0.0
        %3435 = vmatpush2.xpose.msra.mxu0 %v2893
        %3436 = vmatprep.subr.mxu0 0.0
        %3437 = vmatpush2.xpose.msra.mxu0 %v2890
        %3438 = vmatprep.subr.mxu0 0.0
        %3439 = vmatpush2.xpose.msra.mxu0 %v2887
        %3440 = vmatprep.subr.mxu0 0.0
        %3441 = vmatpush2.xpose.msra.mxu0 %v2884
        %3442 = vmatprep.subr.mxu0 0.0
        %3443 = vmatpush2.xpose.msra.mxu0 %v2881
        %3444 = vmatprep.subr.mxu0 0.0
        %3445 = vmatpush2.xpose.msra.mxu0 %v2878
        %3446 = vmatprep.subr.mxu0 0.0
        %3447 = vmatpush2.xpose.msra.mxu0 %v2875
        %3448 = vmatprep.subr.mxu0 0.0
        %3449 = vmatpush2.xpose.msra.mxu0 %v2872
        %3450 = vmatprep.subr.mxu0 0.0
        %3451 = vmatpush2.xpose.msra.mxu0 %v2869
        %3452 = vmatprep.subr.mxu0 0.0
        %3453 = vmatpush2.xpose.msra.mxu0 %v2866
        %3454 = vmatprep.subr.mxu0 0.0
        %3455 = vmatpush2.xpose.msra.mxu0 %v2863
        %3456 = vmatprep.subr.mxu0 0.0
        %3457 = vmatpush2.xpose.msra.mxu0 %v2860
        %3458 = vmatprep.subr.mxu0 0.0
        %3459 = vmatpush2.xpose.msra.mxu0 %v2857
        %3460 = vmatprep.subr.mxu0 0.0
        %3461 = vmatpush2.xpose.msra.mxu0 %v2854
        %3462 = vmatprep.mubr.f32.mxu0 0.0
        %3463 = vmatmul.mubr.f32.gmra.mxu0 %v795
        %v3464 = vpop.f32.mrf.mxu0
        %v3465 = vadd.f32 %v792, %v3464
        %v3466 = vpop.f32.mrf.mxu0
        %v3467 = vadd.f32 %v792, %v3466
        %3468 = vdwg.mxu0
        %v3485 = vrot.slane %v2968, 7
        %v3486 = vrot.slane %v2970, 7
        %v3487 = vrot.slane %v3039, 7
        %v3488 = vrot.slane %v3041, 7
        %v3489 = vrot.slane %v3110, 7
        %v3490 = vrot.slane %v3112, 7
        %v3491 = vrot.slane %v3181, 7
        %v3492 = vrot.slane %v3183, 7
        %v3493 = vrot.slane %v3252, 7
        %v3494 = vrot.slane %v3254, 7
        %v3495 = vrot.slane %v3323, 7
        %v3496 = vrot.slane %v3325, 7
        %v3497 = vrot.slane %v3394, 7
        %v3498 = vrot.slane %v3396, 7
        %v3499 = vrot.slane %v3465, 7
        %v3500 = vrot.slane %v3467, 7
        %vm3517 = vcmask 1040384
        %v3518 = vsel %vm3517, %v1632, %v3485
        %v3519 = vsel %vm3517, %v1634, %v3486
        %v3520 = vsel %vm3517, %v1703, %v3487
        %v3521 = vsel %vm3517, %v1705, %v3488
        %v3522 = vsel %vm3517, %v1774, %v3489
        %v3523 = vsel %vm3517, %v1776, %v3490
        %v3524 = vsel %vm3517, %v1845, %v3491
        %v3525 = vsel %vm3517, %v1847, %v3492
        %v3526 = vsel %vm3517, %v1916, %v3493
        %v3527 = vsel %vm3517, %v1918, %v3494
        %v3528 = vsel %vm3517, %v1987, %v3495
        %v3529 = vsel %vm3517, %v1989, %v3496
        %v3530 = vsel %vm3517, %v2058, %v3497
        %v3531 = vsel %vm3517, %v2060, %v3498
        %v3532 = vsel %vm3517, %v2129, %v3499
        %v3533 = vsel %vm3517, %v2131, %v3500
        %v3550 = vcombine.low %v3518, %v3519
        %v3551 = vcombine.low %v3520, %v3521
        %v3553 = vunpack.c.l.s4 1983009808
        %v3554 = vunpack.c.0.s8 %v3553
        %v3555 = vlaneseq
        %v3556 = vshrl.u32 %v3555, 7
        %v3557 = vsub.s32 %v3554, %v3556
        %v3558 = vrot.slane %v3550, %v3557
        %v3560 = vunpack.c.l.s4 1983009808
        %v3561 = vunpack.c.0.s8 %v3560
        %v3562 = vlaneseq
        %v3563 = vshrl.u32 %v3562, 7
        %v3564 = vsub.s32 %v3561, %v3563
        %v3565 = vrot.slane %v3551, %v3564
        %v3566 = vcombine.low %v3558, %v3565
        %v3567 = vcombine.low %v3522, %v3523
        %v3568 = vcombine.low %v3524, %v3525
        %v3570 = vunpack.c.l.s4 1983009808
        %v3571 = vunpack.c.0.s8 %v3570
        %v3572 = vlaneseq
        %v3573 = vshrl.u32 %v3572, 7
        %v3574 = vsub.s32 %v3571, %v3573
        %v3575 = vrot.slane %v3567, %v3574
        %v3577 = vunpack.c.l.s4 1983009808
        %v3578 = vunpack.c.0.s8 %v3577
        %v3579 = vlaneseq
        %v3580 = vshrl.u32 %v3579, 7
        %v3581 = vsub.s32 %v3578, %v3580
        %v3582 = vrot.slane %v3568, %v3581
        %v3583 = vcombine.low %v3575, %v3582
        %v3584 = vcombine.low %v3526, %v3527
        %v3585 = vcombine.low %v3528, %v3529
        %v3587 = vunpack.c.l.s4 1983009808
        %v3588 = vunpack.c.0.s8 %v3587
        %v3589 = vlaneseq
        %v3590 = vshrl.u32 %v3589, 7
        %v3591 = vsub.s32 %v3588, %v3590
        %v3592 = vrot.slane %v3584, %v3591
        %v3594 = vunpack.c.l.s4 1983009808
        %v3595 = vunpack.c.0.s8 %v3594
        %v3596 = vlaneseq
        %v3597 = vshrl.u32 %v3596, 7
        %v3598 = vsub.s32 %v3595, %v3597
        %v3599 = vrot.slane %v3585, %v3598
        %v3600 = vcombine.low %v3592, %v3599
        %v3601 = vcombine.low %v3530, %v3531
        %v3602 = vcombine.low %v3532, %v3533
        %v3604 = vunpack.c.l.s4 1983009808
        %v3605 = vunpack.c.0.s8 %v3604
        %v3606 = vlaneseq
        %v3607 = vshrl.u32 %v3606, 7
        %v3608 = vsub.s32 %v3605, %v3607
        %v3609 = vrot.slane %v3601, %v3608
        %v3611 = vunpack.c.l.s4 1983009808
        %v3612 = vunpack.c.0.s8 %v3611
        %v3613 = vlaneseq
        %v3614 = vshrl.u32 %v3613, 7
        %v3615 = vsub.s32 %v3612, %v3614
        %v3616 = vrot.slane %v3602, %v3615
        %v3617 = vcombine.low %v3609, %v3616
        %3622 = vst [vmem:[%s253] sm:$0xff] %v3566
        %3623 = vst [vmem:[%s253 + $0x8] sm:$0xff] %v3583
        %3624 = vst [vmem:[%s253 + $0x10] sm:$0xff] %v3600
        %3625 = vst [vmem:[%s253 + $0x18] sm:$0xff] %v3617
        %s3626 = sand.u32 %s144, 1
        %s3627 = scalar_lea.sflag [#allocation4], %s3626
        %s3628 = sand.u32 %s144, 1
        %s3629 = smul.addr %s3628, 32
        %s3630 = scalar_lea.vmem [#allocation3], %s3629
        // Predicated region
        $region37: #{tpu_custom_call.1} parent=35 // pred_check
          %p3631 = pneg %p154
        $region38: #{tpu_custom_call.1} parent=35 // pred_check_branch
          %3633 = sbr.rel (%p3631) target = $region40
        $region39: #{tpu_custom_call.1} parent=35 // pred_region
          %s3634 = smul.u32 16, %s24
          %s3636 = ssub.s32 512, 512
          %3637 = vsyncadd %s3627, %s3636
          %s3638 = smul.addr %s23, 16
          %s3639 = sadd.s32 %s3634, %s3638
          %s3640 = smul.addr %s3639, 32
          %s3641 = scalar_lea.hbm %s4, %s3640
          %s3643 = sshll.u32 %s3630, 4
          %s3644 = int_to_ptr.vmem [resolvable:$true] %s3643
          %3646 = dma.vmem_to_hbm [thread:$0]  %s3644, 512, %s3641, %s3627
        $region40: #{tpu_custom_call.1} parent=35 // pred_fallthru
          _
      $region36: #{tpu_custom_call.1} parent=5 // pred_fallthru
        _
      %p3647 = scmp.le.s32.totalorder 2, %s14
      // Predicated region
      $region41: #{tpu_custom_call.1} parent=5 // pred_check
        %p3648 = pneg %p3647
      $region42: #{tpu_custom_call.1} parent=5 // pred_check_branch
        %3650 = sbr.rel (%p3648) target = $region44
      $region43: #{tpu_custom_call.1} parent=5 // pred_region
        %s3651 = ssub.s32 %s14, 2
        // Predicated region
        $region45: #{tpu_custom_call.1} parent=43 // pred_check
          %p3652 = pneg %p160
        $region46: #{tpu_custom_call.1} parent=43 // pred_check_branch
          %3654 = sbr.rel (%p3652) target = $region48
        $region47: #{tpu_custom_call.1} parent=43 // pred_region
          %s3655 = sand.u32 %s145, 1
          %s3656 = scalar_lea.sflag [#allocation4], %s3655
          %s3657 = sand.u32 %s145, 1
          %s3658 = smul.addr %s3657, 32
          %s3659 = scalar_lea.vmem [#allocation3], %s3658
          %3660 = dma.done %s3656, 512
        $region48: #{tpu_custom_call.1} parent=43 // pred_fallthru
          _
      $region44: #{tpu_custom_call.1} parent=5 // pred_fallthru
        _
    $region6: #{tpu_custom_call.1} parent=1 // loop_footer
      %s18 = sadd.s32 1, %s14
    $region7: #{tpu_custom_call.1} parent=1 // loop_footer_branch
      %13 = sbr.rel target = $region3
    $region8: #{tpu_custom_call.1} parent=1 // loop_exit
      _
    %3661 = vsyncpa [#allocation4], 1
    %s3662 = scalar_lea.sflag [#allocation4], 1
    %3663 = vsyncpa %s3662, 1

</llo_original>
